<compile_context>
chip_gen: v7x
topology: tpu7x:2x2x1
jax: 0.10.0
libtpu: 0.0.40
codegen_flags: <defaults>
</compile_context>

<pallas_src>
import math

import jax
import jax.numpy as jnp
from jax.experimental import pallas as pl
from jax.experimental.pallas import tpu as pltpu

# ---------------- problem sizes ------------------------------------------------
D_IN = 4            # input channels
L = 16              # input sequence length
D_OUT = 32          # embedding / block dim
STRIDE = 2
NCONV = 4           # depthwise branches in Embedding
D_HID = D_OUT // NCONV            # 8
D_FFN = D_OUT // 4                # 8
PAD_MAX = STRIDE + NCONV - 2      # 4   largest depthwise padding
KTAPS = 2 * PAD_MAX + 1           # 9   folded tap count
L_OUT = (L - 1) // STRIDE + 1     # 8
BATCH = 16          # demo batch: wocat = BATCH*L_OUT = 128 -> full vreg lanes

# ---------------- packed slab layout (single VMEM parameter input) --------------
# row block 0  [0, 32):    embedding params, 16 cols
C_W1 = 0                           # conv1 weight, branch-replicated (cols 0:4)
C_B1 = C_W1 + D_IN                 # conv1 bias                      (col 4)
C_DW = C_B1 + 1                    # folded 9-tap depthwise weights  (cols 5:14)
C_BNG = C_DW + KTAPS               # BatchNorm gamma                 (col 14)
C_BNB = C_BNG + 1                  # BatchNorm beta                  (col 15)
PEMB_COLS = C_BNB + 1              # 16
# row block 1  [32, 200):  projection / FFN weights, 33 cols (last col = bias)
R_KVQ = 0
N_KVQ = ((2 * D_OUT + 1 + 7) // 8) * 8      # 72 (65 used, sublane aligned)
R_PROJ = R_KVQ + N_KVQ                      # 72
R_FFN1 = R_PROJ + D_OUT                     # 104
R_FFN2 = R_FFN1 + D_OUT                     # 136
R_TOT = R_FFN2 + D_OUT                      # 168
# row block 2  [200, 232): per-channel columns: ln1 g/b, ln2 g/b, residual scales
PCOL_COLS = 6
# row block 3  [232, 248): 9 per-tap validity masks (padded to 16 rows)
MASK_ROWS = 16
# row block 4  [248, 248+wocat):         softmax segment matrix seg  (wocat, n_b)
# row block 5  [248+wocat, ... + n_b):   its transpose          segT (n_b, wocat)
R_PWB = D_OUT                               # 32
R_PCOL = R_PWB + R_TOT                      # 200
R_MASK = R_PCOL + D_OUT                     # 232
R_SEG = R_MASK + MASK_ROWS                  # 248

# per-tap position offset inside a length-L_OUT output block; even taps read the
# even-position half of the deinterleaved input, odd taps read the odd half.
TAP_OFFS = [j // 2 - 2 if j % 2 == 0 else (j - 5) // 2 for j in range(KTAPS)]


# ---------------- elementwise helpers (traced inside the kernel) ----------------
def _erf(x):
    # Abramowitz & Stegun 7.1.26 erf polynomial; matches exact erf to ~1.5e-7.
    a1, a2, a3, a4, a5 = 0.254829592, -0.284496736, 1.421413741, -1.453152027, 1.061405429
    p = 0.3275911
    ax = jnp.abs(x)
    t = 1.0 / (1.0 + p * ax)
    poly = t * (a1 + t * (a2 + t * (a3 + t * (a4 + t * a5))))
    e = 1.0 - poly * jnp.exp(-ax * ax)
    return jnp.where(x >= 0, e, -e)


def _gelu(x):
    # exact (erf-based) GELU, like torch.nn.GELU()
    return 0.5 * x * (1.0 + _erf(x * (1.0 / math.sqrt(2.0))))


# ---------------- fused LFEL kernel ---------------------------------------------
def lfel_kernel(x_ref, slab_ref, out_ref):
    wocat = out_ref.shape[1]                 # n_b * L_OUT  (batch along lanes)
    n_b = wocat // L_OUT
    r_segt = R_SEG + wocat

    # -------- embedding params (slab rows 0:32) --------
    pemb = slab_ref[0:D_OUT, 0:PEMB_COLS]                        # (32, 16)
    w1r = pemb[:, C_W1:C_W1 + D_IN]
    b1 = pemb[:, C_B1:C_B1 + 1]
    dwp = pemb[:, C_DW:C_DW + KTAPS]
    bng = pemb[:, C_BNG:C_BNG + 1]
    bnb = pemb[:, C_BNB:C_BNB + 1]

    # conv1 (k=1) on the parity-deinterleaved, edge-padded input:
    #   columns = [2 pad | even positions (wocat) | odd positions (wocat) | 2 pad]
    hp = jnp.dot(w1r, x_ref[...], preferred_element_type=jnp.float32) + b1   # (32, 2*wocat+4)

    # folded depthwise (all 4 stride-2 branches at once): 9 taps, each a static
    # lane-offset slice * precomputed validity mask * per-channel tap weight.
    masks = slab_ref[R_MASK:R_MASK + KTAPS, 0:wocat]             # (9, wocat)
    y = jnp.zeros((D_OUT, wocat), jnp.float32)
    for j in range(KTAPS):
        if j % 2 == 0:
            start = 2 + TAP_OFFS[j]                  # even-position half
        else:
            start = 2 + wocat + TAP_OFFS[j]          # odd-position half
        sl = hp[:, start:start + wocat]
        y = y + sl * masks[j:j + 1, :] * dwp[:, j:j + 1]

    # BatchNorm1d (training-mode batch statistics, biased variance) + GELU
    inv_cnt = 1.0 / float(wocat)                                  # compile-time const
    mean = jnp.sum(y, axis=1, keepdims=True) * inv_cnt
    yc = y - mean
    var = jnp.sum(yc * yc, axis=1, keepdims=True) * inv_cnt
    y = _gelu(yc * jax.lax.rsqrt(var + 1e-5) * bng + bnb)         # (32, wocat)

    # -------- BA_FFN_Block (LN + BroadcastAttention + LN + FFN) --------
    pcol = slab_ref[R_PCOL:R_PCOL + D_OUT, 0:PCOL_COLS]           # (32, 6)
    ln1g, ln1b = pcol[:, 0:1], pcol[:, 1:2]
    ln2g, ln2b = pcol[:, 2:3], pcol[:, 3:4]
    res0, res1 = pcol[:, 4:5], pcol[:, 5:6]                       # folded Add weights

    def layer_norm(v, g, b):                # normalize over channels (sublanes)
        mu = jnp.mean(v, axis=0, keepdims=True)
        d = v - mu
        vr = jnp.mean(d * d, axis=0, keepdims=True)
        return d * jax.lax.rsqrt(vr + 1e-5) * g + b

    xn = layer_norm(y, ln1g, ln1b)
    wkvq = slab_ref[R_PWB + R_KVQ:R_PWB + R_KVQ + N_KVQ, 0:D_OUT]             # (72, 32)
    bkvq = slab_ref[R_PWB + R_KVQ:R_PWB + R_KVQ + N_KVQ, D_OUT:D_OUT + 1]
    kvq = jnp.dot(wkvq, xn, preferred_element_type=jnp.float32) + bkvq        # (72, wocat)
    k = kvq[0:D_OUT]
    v = kvq[D_OUT:2 * D_OUT]
    q = kvq[2 * D_OUT:2 * D_OUT + 1]                                          # (1, wocat)

    # per-sample softmax / context, vectorized with precomputed 0/1 segment
    # matrices (a single global-max shift is mathematically exact per segment).
    seg = slab_ref[R_SEG:R_SEG + wocat, 0:n_b]                    # (wocat, n_b)
    segt = slab_ref[r_segt:r_segt + n_b, 0:wocat]                 # (n_b, wocat)
    e = jnp.exp(q - jnp.max(q, axis=1, keepdims=True))            # (1, wocat)
    denom = jnp.dot(e, seg, preferred_element_type=jnp.float32)   # (1, n_b)
    ctx = (jnp.dot(k * e, seg, preferred_element_type=jnp.float32)
           * pl.reciprocal(denom, approx=True))                   # (32, n_b)
    ctx_b = jnp.dot(ctx, segt, preferred_element_type=jnp.float32)  # (32, wocat)
    attn_in = jnp.maximum(v, 0.0) * ctx_b

    wp = slab_ref[R_PWB + R_PROJ:R_PWB + R_PROJ + D_OUT, 0:D_OUT]   # pre-scaled by add1 w[0]
    bp = slab_ref[R_PWB + R_PROJ:R_PWB + R_PROJ + D_OUT, D_OUT:D_OUT + 1]
    attn = jnp.dot(wp, attn_in, preferred_element_type=jnp.float32) + bp
    x1 = attn + res0 * y                                          # Add #1 (folded)

    xn2 = layer_norm(x1, ln2g, ln2b)
    wf1 = slab_ref[R_PWB + R_FFN1:R_PWB + R_FFN1 + D_OUT, 0:D_OUT]  # rows >= D_FFN are zero
    bf1 = slab_ref[R_PWB + R_FFN1:R_PWB + R_FFN1 + D_OUT, D_OUT:D_OUT + 1]
    hf = _gelu(jnp.dot(wf1, xn2, preferred_element_type=jnp.float32) + bf1)
    wf2 = slab_ref[R_PWB + R_FFN2:R_PWB + R_FFN2 + D_OUT, 0:D_OUT]  # pre-scaled by add2 w[0]
    bf2 = slab_ref[R_PWB + R_FFN2:R_PWB + R_FFN2 + D_OUT, D_OUT:D_OUT + 1]
    f = jnp.dot(wf2, hf, preferred_element_type=jnp.float32) + bf2
    out_ref[...] = f + res1 * x1                                  # Add #2 (folded), dense store


# ---------------- wrapper: ONE pallas_call (2 input DMAs) -----------------------
def lfel_forward(x, slab):
    """x: (N, D_IN, L) -> (N, D_OUT, L_OUT); slab from pack_params(params, N)."""
    n_b = x.shape[0]
    assert x.shape[1] == D_IN and x.shape[2] == L and L == 2 * L_OUT
    w = n_b * L_OUT
    # parity-deinterleave (even/odd positions, sample-major within each half) plus a
    # 2-column edge pad; padded columns are only ever read under a zero mask.
    xd = x.transpose(1, 0, 2).reshape(D_IN, n_b, L_OUT, 2)        # [d, s, u, parity]
    xd = xd.transpose(0, 3, 1, 2).reshape(D_IN, 2 * w)            # [d, (parity, s, u)]
    xd = jnp.pad(xd, ((0, 0), (2, 2)))
    vmem = pl.BlockSpec(memory_space=pltpu.MemorySpace.VMEM)
    # Single full-lane group -> gridless.  For batches >> 16, split samples into
    # groups of 16 over a grid axis with dimension_semantics=("parallel",) so both
    # v7x TensorCores are used.
    out2d = pl.pallas_call(
        lfel_kernel,
        out_shape=jax.ShapeDtypeStruct((D_OUT, w), jnp.float32),
        in_specs=[vmem, vmem],
        out_specs=vmem,
    )(xd, slab)
    # lane-dense kernel output -> module's (N, D_OUT, L_OUT) layout (cheap XLA
    # relayout inside the same jitted program, no extra dispatch).
    return out2d.reshape(D_OUT, n_b, L_OUT).transpose(1, 0, 2)


# ---------------- parameter packing (one-time, outside the hot path) ------------
def pack_params(p, n_b):
    wocat = n_b * L_OUT

    def add_w(w):                       # Add-module weight normalisation, folded
        w = jnp.maximum(w, 0.0)
        return w / (jnp.sum(w) + 1e-12)

    a1 = add_w(p['add1_w'])
    a2 = add_w(p['add2_w'])

    # fold the 4 depthwise branches into one zero-padded 9-tap matrix
    dwp = jnp.zeros((D_OUT, KTAPS), jnp.float32)
    for i, dw in enumerate([p['dw0'], p['dw1'], p['dw2'], p['dw3']]):
        kk = 2 * i + 2 * STRIDE - 1
        off = PAD_MAX - (STRIDE + i - 1)            # 3 - i
        dwp = dwp.at[i * D_HID:(i + 1) * D_HID, off:off + kk].set(dw)

    # fold the NCONV branch broadcast into conv1
    w1r = jnp.tile(p['w1'], (NCONV, 1))             # (32, 4)
    b1r = jnp.tile(p['b1'], (NCONV, 1))             # (32, 1)

    width = max(D_OUT + 1, wocat)
    rows = R_SEG + wocat + n_b
    slab = jnp.zeros((rows, width), jnp.float32)

    # --- embedding block (rows 0..31) ---
    slab = slab.at[0:D_OUT, C_W1:C_W1 + D_IN].set(w1r)
    slab = slab.at[0:D_OUT, C_B1].set(b1r[:, 0])
    slab = slab.at[0:D_OUT, C_DW:C_DW + KTAPS].set(dwp)
    slab = slab.at[0:D_OUT, C_BNG].set(p['bn_g'][:, 0])
    slab = slab.at[0:D_OUT, C_BNB].set(p['bn_b'][:, 0])

    # --- projection / FFN weights (rows 32..199), bias in the last column ---
    r = R_PWB
    slab = slab.at[r + R_KVQ:r + R_KVQ + D_OUT, 0:D_OUT].set(p['wk'])
    slab = slab.at[r + R_KVQ:r + R_KVQ + D_OUT, D_OUT].set(p['bk'][:, 0])
    slab = slab.at[r + R_KVQ + D_OUT:r + R_KVQ + 2 * D_OUT, 0:D_OUT].set(p['wv'])
    slab = slab.at[r + R_KVQ + D_OUT:r + R_KVQ + 2 * D_OUT, D_OUT].set(p['bv'][:, 0])
    slab = slab.at[r + R_KVQ + 2 * D_OUT, 0:D_OUT].set(p['wq'][0])
    slab = slab.at[r + R_KVQ + 2 * D_OUT, D_OUT].set(p['bq'][0, 0])
    slab = slab.at[r + R_PROJ:r + R_PROJ + D_OUT, 0:D_OUT].set(a1[0] * p['wp'])
    slab = slab.at[r + R_PROJ:r + R_PROJ + D_OUT, D_OUT].set(a1[0] * p['bp'][:, 0])
    slab = slab.at[r + R_FFN1:r + R_FFN1 + D_FFN, 0:D_OUT].set(p['wf1'])
    slab = slab.at[r + R_FFN1:r + R_FFN1 + D_FFN, D_OUT].set(p['bf1'][:, 0])
    slab = slab.at[r + R_FFN2:r + R_FFN2 + D_OUT, 0:D_FFN].set(a2[0] * p['wf2'])
    slab = slab.at[r + R_FFN2:r + R_FFN2 + D_OUT, D_OUT].set(a2[0] * p['bf2'][:, 0])

    # --- per-channel columns (rows 200..231): ln1, ln2, folded residual scales ---
    ones = jnp.ones((D_OUT, 1), jnp.float32)
    pcol = jnp.concatenate([p['ln1_g'], p['ln1_b'], p['ln2_g'], p['ln2_b'],
                            a1[1] * ones, a2[1] * ones], axis=1)
    slab = slab.at[R_PCOL:R_PCOL + D_OUT, 0:PCOL_COLS].set(pcol)

    # --- per-tap validity masks (rows 232..240): 1 iff the shifted position stays
    #     inside the same sample's length-L_OUT block (also covers the edge pads) ---
    u = jnp.arange(wocat) % L_OUT
    offs = jnp.asarray(TAP_OFFS)
    valid = u[None, :] + offs[:, None]
    masks = ((valid >= 0) & (valid < L_OUT)).astype(jnp.float32)  # (9, wocat)
    slab = slab.at[R_MASK:R_MASK + KTAPS, 0:wocat].set(masks)

    # --- softmax segment matrices: seg (wocat, n_b) and segT (n_b, wocat) ---
    col_s = jnp.arange(wocat) // L_OUT
    segt = (col_s[None, :] == jnp.arange(n_b)[:, None]).astype(jnp.float32)
    slab = slab.at[R_SEG:R_SEG + wocat, 0:n_b].set(segt.T)
    slab = slab.at[R_SEG + wocat:R_SEG + wocat + n_b, 0:wocat].set(segt)
    return slab


# ---------------- deterministic parameter init (shapes from the torch module) ----
def init_params(key):
    ks = jax.random.split(key, 16)

    def nrm(k, shape, scale=0.1):
        return scale * jax.random.normal(k, shape, dtype=jnp.float32)

    wqkv = nrm(ks[4], (1 + 2 * D_OUT, D_OUT))        # qkv_proj weight (Conv1d k=1)
    bqkv = nrm(ks[5], (1 + 2 * D_OUT, 1), 0.02)
    return dict(
        # Embedding
        w1=nrm(ks[0], (D_HID, D_IN)), b1=nrm(ks[1], (D_HID, 1), 0.02),
        dw0=nrm(ks[2], (D_HID, 3)), dw1=nrm(ks[3], (D_HID, 5)),
        dw2=nrm(ks[6], (D_HID, 7)), dw3=nrm(ks[7], (D_HID, 9)),
        bn_g=jnp.ones((D_OUT, 1), jnp.float32), bn_b=jnp.zeros((D_OUT, 1), jnp.float32),
        # BA_FFN_Block
        ln1_g=jnp.ones((D_OUT, 1), jnp.float32), ln1_b=jnp.zeros((D_OUT, 1), jnp.float32),
        wq=wqkv[0:1, :], bq=bqkv[0:1, :],
        wk=wqkv[1:1 + D_OUT, :], bk=bqkv[1:1 + D_OUT, :],
        wv=wqkv[1 + D_OUT:, :], bv=bqkv[1 + D_OUT:, :],
        wp=nrm(ks[8], (D_OUT, D_OUT)), bp=nrm(ks[9], (D_OUT, 1), 0.02),
        add1_w=jnp.ones((2,), jnp.float32),           # Add() initializes w = ones(2)
        ln2_g=jnp.ones((D_OUT, 1), jnp.float32), ln2_b=jnp.zeros((D_OUT, 1), jnp.float32),
        wf1=nrm(ks[10], (D_FFN, D_OUT)), bf1=nrm(ks[11], (D_FFN, 1), 0.02),
        wf2=nrm(ks[12], (D_OUT, D_FFN)), bf2=nrm(ks[13], (D_OUT, 1), 0.02),
        add2_w=jnp.ones((2,), jnp.float32),
    )


# ---------------- pure-JAX reference (sanity check) ------------------------------
def lfel_reference(x, p):
    h = jnp.einsum('oi,nil->nol', p['w1'], x) + p['b1'][None]
    hp = jnp.pad(h, ((0, 0), (0, 0), (PAD_MAX, PAD_MAX)))
    outs = []
    for i, dw in enumerate([p['dw0'], p['dw1'], p['dw2'], p['dw3']]):
        k = 2 * i + 2 * STRIDE - 1
        pad_i = STRIDE + i - 1
        acc = jnp.zeros((x.shape[0], D_HID, L_OUT), jnp.float32)
        for j in range(k):
            s = PAD_MAX - pad_i + j
            acc = acc + hp[:, :, s:s + 2 * L_OUT:2] * dw[None, :, j:j + 1]
        outs.append(acc)
    y = jnp.concatenate(outs, axis=1)
    mu = jnp.mean(y, axis=(0, 2), keepdims=True)
    var = jnp.mean((y - mu) ** 2, axis=(0, 2), keepdims=True)
    y = (y - mu) / jnp.sqrt(var + 1e-5) * p['bn_g'][None] + p['bn_b'][None]
    y = 0.5 * y * (1.0 + jax.scipy.special.erf(y / math.sqrt(2.0)))

    def layernorm(v, g, b):
        mu = jnp.mean(v, axis=1, keepdims=True)
        var = jnp.mean((v - mu) ** 2, axis=1, keepdims=True)
        return (v - mu) / jnp.sqrt(var + 1e-5) * g[None] + b[None]

    def add(w, a, b):
        w = jnp.maximum(w, 0.0)
        w = w / (jnp.sum(w) + 1e-12)
        return w[0] * a + w[1] * b

    xn = layernorm(y, p['ln1_g'], p['ln1_b'])
    q = jnp.einsum('oc,ncl->nol', p['wq'], xn) + p['bq'][None]
    k = jnp.einsum('oc,ncl->nol', p['wk'], xn) + p['bk'][None]
    v = jnp.einsum('oc,ncl->nol', p['wv'], xn) + p['bv'][None]
    scores = jax.nn.softmax(q, axis=-1)
    ctx = jnp.sum(k * scores, axis=-1, keepdims=True)
    attn = jax.nn.relu(v) * ctx
    attn = jnp.einsum('oc,ncl->nol', p['wp'], attn) + p['bp'][None]
    x1 = add(p['add1_w'], attn, y)
    xn2 = layernorm(x1, p['ln2_g'], p['ln2_b'])
    hh = jnp.einsum('fc,ncl->nfl', p['wf1'], xn2) + p['bf1'][None]
    hh = 0.5 * hh * (1.0 + jax.scipy.special.erf(hh / math.sqrt(2.0)))
    f = jnp.einsum('cf,nfl->ncl', p['wf2'], hh) + p['bf2'][None]
    return add(p['add2_w'], f, x1)


if __name__ == "__main__":
    key = jax.random.PRNGKey(0)
    pkey, xkey = jax.random.split(key)
    params = init_params(pkey)
    fwd = jax.jit(lfel_forward)

    # lane-dense batch (16 samples -> 128 lanes) plus the module-sized small batch
    for n_b in (BATCH, 2):
        x = jax.random.normal(jax.random.fold_in(xkey, n_b), (n_b, D_IN, L),
                              dtype=jnp.float32)
        slab = pack_params(params, n_b)      # one-time repack, outside the hot path
        out = jax.block_until_ready(fwd(x, slab))
        ref = jax.block_until_ready(lfel_reference(x, params))
        assert out.shape == (n_b, D_OUT, L_OUT), out.shape
        err = float(jnp.max(jnp.abs(out - ref)))
        if err > 3e-2:
            raise AssertionError(f"kernel/reference mismatch at N={n_b}: max abs err = {err}")
    print("KERNEL_OK")
</pallas_src>

<mosaic_0001>
module attributes {stable_mosaic.version = 11 : i64} {
  func.func @lfel_kernel(%arg0: memref<4x260xf32, #tpu.memory_space<vmem>>, %arg1: memref<392x128xf32, #tpu.memory_space<vmem>>, %arg2: memref<32x128xf32, #tpu.memory_space<vmem>>) attributes {dimension_semantics = [], scalar_prefetch = 0 : i64, scratch_operands = 0 : i64, tpu.core_type = #tpu.core_type<tc>} {
    %c0 = arith.constant 0 : index
    %c0_0 = arith.constant 0 : index
    %0 = vector.load %arg1[%c0, %c0_0] : memref<392x128xf32, #tpu.memory_space<vmem>>, vector<32x16xf32>
    %1 = vector.extract_strided_slice %0 {offsets = [0, 0], sizes = [32, 4], strides = [1, 1]} : vector<32x16xf32> to vector<32x4xf32>
    %2 = vector.extract_strided_slice %0 {offsets = [0, 4], sizes = [32, 1], strides = [1, 1]} : vector<32x16xf32> to vector<32x1xf32>
    %3 = vector.extract_strided_slice %0 {offsets = [0, 5], sizes = [32, 9], strides = [1, 1]} : vector<32x16xf32> to vector<32x9xf32>
    %4 = vector.extract_strided_slice %0 {offsets = [0, 14], sizes = [32, 1], strides = [1, 1]} : vector<32x16xf32> to vector<32x1xf32>
    %5 = vector.extract_strided_slice %0 {offsets = [0, 15], sizes = [32, 1], strides = [1, 1]} : vector<32x16xf32> to vector<32x1xf32>
    %c0_1 = arith.constant 0 : index
    %c0_2 = arith.constant 0 : index
    %6 = vector.load %arg0[%c0_1, %c0_2] : memref<4x260xf32, #tpu.memory_space<vmem>>, vector<4x260xf32>
    %cst = arith.constant dense<0.000000e+00> : vector<32x260xf32>
    %7 = tpu.matmul %1, %6, %cst {dimension_numbers = #tpu.dot_dimension_numbers<[1], [0], [0], [1], [0, 0, 1, 1], [], []>} : vector<32x4xf32>, vector<4x260xf32>, vector<32x260xf32> -> vector<32x260xf32>
    %8 = vector.broadcast %2 : vector<32x1xf32> to vector<32x260xf32>
    %9 = arith.addf %7, %8 : vector<32x260xf32>
    %c232 = arith.constant 232 : index
    %c0_3 = arith.constant 0 : index
    %10 = vector.load %arg1[%c232, %c0_3] : memref<392x128xf32, #tpu.memory_space<vmem>>, vector<9x128xf32>
    %cst_4 = arith.constant 0.000000e+00 : f32
    %11 = vector.broadcast %cst_4 : f32 to vector<32x128xf32>
    %12 = vector.extract_strided_slice %9 {offsets = [0, 0], sizes = [32, 128], strides = [1, 1]} : vector<32x260xf32> to vector<32x128xf32>
    %13 = vector.extract_strided_slice %10 {offsets = [0, 0], sizes = [1, 128], strides = [1, 1]} : vector<9x128xf32> to vector<1x128xf32>
    %14 = vector.broadcast %13 : vector<1x128xf32> to vector<32x128xf32>
    %15 = arith.mulf %12, %14 : vector<32x128xf32>
    %16 = vector.extract_strided_slice %3 {offsets = [0, 0], sizes = [32, 1], strides = [1, 1]} : vector<32x9xf32> to vector<32x1xf32>
    %17 = vector.broadcast %16 : vector<32x1xf32> to vector<32x128xf32>
    %18 = arith.mulf %15, %17 : vector<32x128xf32>
    %19 = arith.addf %11, %18 : vector<32x128xf32>
    %20 = vector.extract_strided_slice %9 {offsets = [0, 128], sizes = [32, 128], strides = [1, 1]} : vector<32x260xf32> to vector<32x128xf32>
    %21 = vector.extract_strided_slice %10 {offsets = [1, 0], sizes = [1, 128], strides = [1, 1]} : vector<9x128xf32> to vector<1x128xf32>
    %22 = vector.broadcast %21 : vector<1x128xf32> to vector<32x128xf32>
    %23 = arith.mulf %20, %22 : vector<32x128xf32>
    %24 = vector.extract_strided_slice %3 {offsets = [0, 1], sizes = [32, 1], strides = [1, 1]} : vector<32x9xf32> to vector<32x1xf32>
    %25 = vector.broadcast %24 : vector<32x1xf32> to vector<32x128xf32>
    %26 = arith.mulf %23, %25 : vector<32x128xf32>
    %27 = arith.addf %19, %26 : vector<32x128xf32>
    %28 = vector.extract_strided_slice %9 {offsets = [0, 1], sizes = [32, 128], strides = [1, 1]} : vector<32x260xf32> to vector<32x128xf32>
    %29 = vector.extract_strided_slice %10 {offsets = [2, 0], sizes = [1, 128], strides = [1, 1]} : vector<9x128xf32> to vector<1x128xf32>
    %30 = vector.broadcast %29 : vector<1x128xf32> to vector<32x128xf32>
    %31 = arith.mulf %28, %30 : vector<32x128xf32>
    %32 = vector.extract_strided_slice %3 {offsets = [0, 2], sizes = [32, 1], strides = [1, 1]} : vector<32x9xf32> to vector<32x1xf32>
    %33 = vector.broadcast %32 : vector<32x1xf32> to vector<32x128xf32>
    %34 = arith.mulf %31, %33 : vector<32x128xf32>
    %35 = arith.addf %27, %34 : vector<32x128xf32>
    %36 = vector.extract_strided_slice %9 {offsets = [0, 129], sizes = [32, 128], strides = [1, 1]} : vector<32x260xf32> to vector<32x128xf32>
    %37 = vector.extract_strided_slice %10 {offsets = [3, 0], sizes = [1, 128], strides = [1, 1]} : vector<9x128xf32> to vector<1x128xf32>
    %38 = vector.broadcast %37 : vector<1x128xf32> to vector<32x128xf32>
    %39 = arith.mulf %36, %38 : vector<32x128xf32>
    %40 = vector.extract_strided_slice %3 {offsets = [0, 3], sizes = [32, 1], strides = [1, 1]} : vector<32x9xf32> to vector<32x1xf32>
    %41 = vector.broadcast %40 : vector<32x1xf32> to vector<32x128xf32>
    %42 = arith.mulf %39, %41 : vector<32x128xf32>
    %43 = arith.addf %35, %42 : vector<32x128xf32>
    %44 = vector.extract_strided_slice %9 {offsets = [0, 2], sizes = [32, 128], strides = [1, 1]} : vector<32x260xf32> to vector<32x128xf32>
    %45 = vector.extract_strided_slice %10 {offsets = [4, 0], sizes = [1, 128], strides = [1, 1]} : vector<9x128xf32> to vector<1x128xf32>
    %46 = vector.broadcast %45 : vector<1x128xf32> to vector<32x128xf32>
    %47 = arith.mulf %44, %46 : vector<32x128xf32>
    %48 = vector.extract_strided_slice %3 {offsets = [0, 4], sizes = [32, 1], strides = [1, 1]} : vector<32x9xf32> to vector<32x1xf32>
    %49 = vector.broadcast %48 : vector<32x1xf32> to vector<32x128xf32>
    %50 = arith.mulf %47, %49 : vector<32x128xf32>
    %51 = arith.addf %43, %50 : vector<32x128xf32>
    %52 = vector.extract_strided_slice %9 {offsets = [0, 130], sizes = [32, 128], strides = [1, 1]} : vector<32x260xf32> to vector<32x128xf32>
    %53 = vector.extract_strided_slice %10 {offsets = [5, 0], sizes = [1, 128], strides = [1, 1]} : vector<9x128xf32> to vector<1x128xf32>
    %54 = vector.broadcast %53 : vector<1x128xf32> to vector<32x128xf32>
    %55 = arith.mulf %52, %54 : vector<32x128xf32>
    %56 = vector.extract_strided_slice %3 {offsets = [0, 5], sizes = [32, 1], strides = [1, 1]} : vector<32x9xf32> to vector<32x1xf32>
    %57 = vector.broadcast %56 : vector<32x1xf32> to vector<32x128xf32>
    %58 = arith.mulf %55, %57 : vector<32x128xf32>
    %59 = arith.addf %51, %58 : vector<32x128xf32>
    %60 = vector.extract_strided_slice %9 {offsets = [0, 3], sizes = [32, 128], strides = [1, 1]} : vector<32x260xf32> to vector<32x128xf32>
    %61 = vector.extract_strided_slice %10 {offsets = [6, 0], sizes = [1, 128], strides = [1, 1]} : vector<9x128xf32> to vector<1x128xf32>
    %62 = vector.broadcast %61 : vector<1x128xf32> to vector<32x128xf32>
    %63 = arith.mulf %60, %62 : vector<32x128xf32>
    %64 = vector.extract_strided_slice %3 {offsets = [0, 6], sizes = [32, 1], strides = [1, 1]} : vector<32x9xf32> to vector<32x1xf32>
    %65 = vector.broadcast %64 : vector<32x1xf32> to vector<32x128xf32>
    %66 = arith.mulf %63, %65 : vector<32x128xf32>
    %67 = arith.addf %59, %66 : vector<32x128xf32>
    %68 = vector.extract_strided_slice %9 {offsets = [0, 131], sizes = [32, 128], strides = [1, 1]} : vector<32x260xf32> to vector<32x128xf32>
    %69 = vector.extract_strided_slice %10 {offsets = [7, 0], sizes = [1, 128], strides = [1, 1]} : vector<9x128xf32> to vector<1x128xf32>
    %70 = vector.broadcast %69 : vector<1x128xf32> to vector<32x128xf32>
    %71 = arith.mulf %68, %70 : vector<32x128xf32>
    %72 = vector.extract_strided_slice %3 {offsets = [0, 7], sizes = [32, 1], strides = [1, 1]} : vector<32x9xf32> to vector<32x1xf32>
    %73 = vector.broadcast %72 : vector<32x1xf32> to vector<32x128xf32>
    %74 = arith.mulf %71, %73 : vector<32x128xf32>
    %75 = arith.addf %67, %74 : vector<32x128xf32>
    %76 = vector.extract_strided_slice %9 {offsets = [0, 4], sizes = [32, 128], strides = [1, 1]} : vector<32x260xf32> to vector<32x128xf32>
    %77 = vector.extract_strided_slice %10 {offsets = [8, 0], sizes = [1, 128], strides = [1, 1]} : vector<9x128xf32> to vector<1x128xf32>
    %78 = vector.broadcast %77 : vector<1x128xf32> to vector<32x128xf32>
    %79 = arith.mulf %76, %78 : vector<32x128xf32>
    %80 = vector.extract_strided_slice %3 {offsets = [0, 8], sizes = [32, 1], strides = [1, 1]} : vector<32x9xf32> to vector<32x1xf32>
    %81 = vector.broadcast %80 : vector<32x1xf32> to vector<32x128xf32>
    %82 = arith.mulf %79, %81 : vector<32x128xf32>
    %83 = arith.addf %75, %82 : vector<32x128xf32>
    %cst_5 = arith.constant dense<0.000000e+00> : vector<32xf32>
    %84 = vector.multi_reduction <add>, %83, %cst_5 [1] : vector<32x128xf32> to vector<32xf32>
    %85 = vector.shape_cast %84 : vector<32xf32> to vector<32x1xf32>
    %cst_6 = arith.constant 7.812500e-03 : f32
    %86 = vector.broadcast %cst_6 : f32 to vector<32x1xf32>
    %87 = arith.mulf %85, %86 : vector<32x1xf32>
    %88 = vector.broadcast %87 : vector<32x1xf32> to vector<32x128xf32>
    %89 = arith.subf %83, %88 : vector<32x128xf32>
    %90 = arith.mulf %89, %89 : vector<32x128xf32>
    %cst_7 = arith.constant dense<0.000000e+00> : vector<32xf32>
    %91 = vector.multi_reduction <add>, %90, %cst_7 [1] : vector<32x128xf32> to vector<32xf32>
    %92 = vector.shape_cast %91 : vector<32xf32> to vector<32x1xf32>
    %cst_8 = arith.constant 7.812500e-03 : f32
    %93 = vector.broadcast %cst_8 : f32 to vector<32x1xf32>
    %94 = arith.mulf %92, %93 : vector<32x1xf32>
    %cst_9 = arith.constant 9.99999974E-6 : f32
    %95 = vector.broadcast %cst_9 : f32 to vector<32x1xf32>
    %96 = arith.addf %94, %95 : vector<32x1xf32>
    %97 = math.rsqrt %96 : vector<32x1xf32>
    %98 = vector.broadcast %97 : vector<32x1xf32> to vector<32x128xf32>
    %99 = arith.mulf %89, %98 : vector<32x128xf32>
    %100 = vector.broadcast %4 : vector<32x1xf32> to vector<32x128xf32>
    %101 = arith.mulf %99, %100 : vector<32x128xf32>
    %102 = vector.broadcast %5 : vector<32x1xf32> to vector<32x128xf32>
    %103 = arith.addf %101, %102 : vector<32x128xf32>
    %cst_10 = arith.constant 5.000000e-01 : f32
    %104 = vector.broadcast %cst_10 : f32 to vector<32x128xf32>
    %105 = arith.mulf %104, %103 : vector<32x128xf32>
    %cst_11 = arith.constant 0.707106769 : f32
    %106 = vector.broadcast %cst_11 : f32 to vector<32x128xf32>
    %107 = arith.mulf %103, %106 : vector<32x128xf32>
    %108 = math.absf %107 : vector<32x128xf32>
    %cst_12 = arith.constant 0.327591091 : f32
    %109 = vector.broadcast %cst_12 : f32 to vector<32x128xf32>
    %110 = arith.mulf %109, %108 : vector<32x128xf32>
    %cst_13 = arith.constant 1.000000e+00 : f32
    %111 = vector.broadcast %cst_13 : f32 to vector<32x128xf32>
    %112 = arith.addf %111, %110 : vector<32x128xf32>
    %cst_14 = arith.constant 1.000000e+00 : f32
    %113 = vector.broadcast %cst_14 : f32 to vector<32x128xf32>
    %114 = arith.divf %113, %112 : vector<32x128xf32>
    %cst_15 = arith.constant 1.06140542 : f32
    %115 = vector.broadcast %cst_15 : f32 to vector<32x128xf32>
    %116 = arith.mulf %114, %115 : vector<32x128xf32>
    %cst_16 = arith.constant -1.45315206 : f32
    %117 = vector.broadcast %cst_16 : f32 to vector<32x128xf32>
    %118 = arith.addf %117, %116 : vector<32x128xf32>
    %119 = arith.mulf %114, %118 : vector<32x128xf32>
    %cst_17 = arith.constant 1.42141378 : f32
    %120 = vector.broadcast %cst_17 : f32 to vector<32x128xf32>
    %121 = arith.addf %120, %119 : vector<32x128xf32>
    %122 = arith.mulf %114, %121 : vector<32x128xf32>
    %cst_18 = arith.constant -0.284496725 : f32
    %123 = vector.broadcast %cst_18 : f32 to vector<32x128xf32>
    %124 = arith.addf %123, %122 : vector<32x128xf32>
    %125 = arith.mulf %114, %124 : vector<32x128xf32>
    %cst_19 = arith.constant 0.254829586 : f32
    %126 = vector.broadcast %cst_19 : f32 to vector<32x128xf32>
    %127 = arith.addf %126, %125 : vector<32x128xf32>
    %128 = arith.mulf %114, %127 : vector<32x128xf32>
    %cst_20 = arith.constant 0.000000e+00 : f32
    %129 = vector.broadcast %cst_20 : f32 to vector<32x128xf32>
    %130 = arith.subf %129, %108 : vector<32x128xf32>
    %131 = arith.mulf %130, %108 : vector<32x128xf32>
    %132 = math.exp %131 : vector<32x128xf32>
    %133 = arith.mulf %128, %132 : vector<32x128xf32>
    %cst_21 = arith.constant 1.000000e+00 : f32
    %134 = vector.broadcast %cst_21 : f32 to vector<32x128xf32>
    %135 = arith.subf %134, %133 : vector<32x128xf32>
    %cst_22 = arith.constant 0.000000e+00 : f32
    %136 = vector.broadcast %cst_22 : f32 to vector<32x128xf32>
    %137 = arith.cmpf oge, %107, %136 : vector<32x128xf32>
    %cst_23 = arith.constant 0.000000e+00 : f32
    %138 = vector.broadcast %cst_23 : f32 to vector<32x128xf32>
    %139 = arith.subf %138, %135 : vector<32x128xf32>
    %140 = arith.select %137, %135, %139 : vector<32x128xi1>, vector<32x128xf32>
    %cst_24 = arith.constant 1.000000e+00 : f32
    %141 = vector.broadcast %cst_24 : f32 to vector<32x128xf32>
    %142 = arith.addf %141, %140 : vector<32x128xf32>
    %143 = arith.mulf %105, %142 : vector<32x128xf32>
    %c200 = arith.constant 200 : index
    %c0_25 = arith.constant 0 : index
    %144 = vector.load %arg1[%c200, %c0_25] : memref<392x128xf32, #tpu.memory_space<vmem>>, vector<32x6xf32>
    %145 = vector.extract_strided_slice %144 {offsets = [0, 0], sizes = [32, 1], strides = [1, 1]} : vector<32x6xf32> to vector<32x1xf32>
    %146 = vector.extract_strided_slice %144 {offsets = [0, 1], sizes = [32, 1], strides = [1, 1]} : vector<32x6xf32> to vector<32x1xf32>
    %147 = vector.extract_strided_slice %144 {offsets = [0, 2], sizes = [32, 1], strides = [1, 1]} : vector<32x6xf32> to vector<32x1xf32>
    %148 = vector.extract_strided_slice %144 {offsets = [0, 3], sizes = [32, 1], strides = [1, 1]} : vector<32x6xf32> to vector<32x1xf32>
    %149 = vector.extract_strided_slice %144 {offsets = [0, 4], sizes = [32, 1], strides = [1, 1]} : vector<32x6xf32> to vector<32x1xf32>
    %150 = vector.extract_strided_slice %144 {offsets = [0, 5], sizes = [32, 1], strides = [1, 1]} : vector<32x6xf32> to vector<32x1xf32>
    %cst_26 = arith.constant dense<0.000000e+00> : vector<128xf32>
    %151 = vector.multi_reduction <add>, %143, %cst_26 [0] : vector<32x128xf32> to vector<128xf32>
    %152 = vector.shape_cast %151 : vector<128xf32> to vector<1x128xf32>
    %cst_27 = arith.constant 3.200000e+01 : f32
    %153 = vector.broadcast %cst_27 : f32 to vector<1x128xf32>
    %154 = arith.divf %152, %153 : vector<1x128xf32>
    %155 = vector.broadcast %154 : vector<1x128xf32> to vector<32x128xf32>
    %156 = arith.subf %143, %155 : vector<32x128xf32>
    %157 = arith.mulf %156, %156 : vector<32x128xf32>
    %cst_28 = arith.constant dense<0.000000e+00> : vector<128xf32>
    %158 = vector.multi_reduction <add>, %157, %cst_28 [0] : vector<32x128xf32> to vector<128xf32>
    %159 = vector.shape_cast %158 : vector<128xf32> to vector<1x128xf32>
    %cst_29 = arith.constant 3.200000e+01 : f32
    %160 = vector.broadcast %cst_29 : f32 to vector<1x128xf32>
    %161 = arith.divf %159, %160 : vector<1x128xf32>
    %cst_30 = arith.constant 9.99999974E-6 : f32
    %162 = vector.broadcast %cst_30 : f32 to vector<1x128xf32>
    %163 = arith.addf %161, %162 : vector<1x128xf32>
    %164 = math.rsqrt %163 : vector<1x128xf32>
    %165 = vector.broadcast %164 : vector<1x128xf32> to vector<32x128xf32>
    %166 = arith.mulf %156, %165 : vector<32x128xf32>
    %167 = vector.broadcast %145 : vector<32x1xf32> to vector<32x128xf32>
    %168 = arith.mulf %166, %167 : vector<32x128xf32>
    %169 = vector.broadcast %146 : vector<32x1xf32> to vector<32x128xf32>
    %170 = arith.addf %168, %169 : vector<32x128xf32>
    %c32 = arith.constant 32 : index
    %c0_31 = arith.constant 0 : index
    %171 = vector.load %arg1[%c32, %c0_31] : memref<392x128xf32, #tpu.memory_space<vmem>>, vector<72x32xf32>
    %c32_32 = arith.constant 32 : index
    %c32_33 = arith.constant 32 : index
    %172 = vector.load %arg1[%c32_32, %c32_33] : memref<392x128xf32, #tpu.memory_space<vmem>>, vector<72x1xf32>
    %cst_34 = arith.constant dense<0.000000e+00> : vector<72x128xf32>
    %173 = tpu.matmul %171, %170, %cst_34 {dimension_numbers = #tpu.dot_dimension_numbers<[1], [0], [0], [1], [0, 0, 1, 1], [], []>} : vector<72x32xf32>, vector<32x128xf32>, vector<72x128xf32> -> vector<72x128xf32>
    %174 = vector.broadcast %172 : vector<72x1xf32> to vector<72x128xf32>
    %175 = arith.addf %173, %174 : vector<72x128xf32>
    %176 = vector.extract_strided_slice %175 {offsets = [0, 0], sizes = [32, 128], strides = [1, 1]} : vector<72x128xf32> to vector<32x128xf32>
    %177 = vector.extract_strided_slice %175 {offsets = [32, 0], sizes = [32, 128], strides = [1, 1]} : vector<72x128xf32> to vector<32x128xf32>
    %178 = vector.extract_strided_slice %175 {offsets = [64, 0], sizes = [1, 128], strides = [1, 1]} : vector<72x128xf32> to vector<1x128xf32>
    %c248 = arith.constant 248 : index
    %c0_35 = arith.constant 0 : index
    %179 = vector.load %arg1[%c248, %c0_35] : memref<392x128xf32, #tpu.memory_space<vmem>>, vector<128x16xf32>
    %c376 = arith.constant 376 : index
    %c0_36 = arith.constant 0 : index
    %180 = vector.load %arg1[%c376, %c0_36] : memref<392x128xf32, #tpu.memory_space<vmem>>, vector<16x128xf32>
    %cst_37 = arith.constant dense<0xFF800000> : vector<1xf32>
    %181 = vector.multi_reduction <maximumf>, %178, %cst_37 [1] : vector<1x128xf32> to vector<1xf32>
    %182 = vector.shape_cast %181 : vector<1xf32> to vector<1x1xf32>
    %183 = vector.broadcast %182 : vector<1x1xf32> to vector<1x128xf32>
    %184 = arith.subf %178, %183 : vector<1x128xf32>
    %185 = math.exp %184 : vector<1x128xf32>
    %cst_38 = arith.constant dense<0.000000e+00> : vector<1x16xf32>
    %186 = tpu.matmul %185, %179, %cst_38 {dimension_numbers = #tpu.dot_dimension_numbers<[1], [0], [0], [1], [0, 0, 1, 1], [], []>} : vector<1x128xf32>, vector<128x16xf32>, vector<1x16xf32> -> vector<1x16xf32>
    %187 = vector.broadcast %185 : vector<1x128xf32> to vector<32x128xf32>
    %188 = arith.mulf %176, %187 : vector<32x128xf32>
    %cst_39 = arith.constant dense<0.000000e+00> : vector<32x16xf32>
    %189 = tpu.matmul %188, %179, %cst_39 {dimension_numbers = #tpu.dot_dimension_numbers<[1], [0], [0], [1], [0, 0, 1, 1], [], []>} : vector<32x128xf32>, vector<128x16xf32>, vector<32x16xf32> -> vector<32x16xf32>
    %190 = tpu.reciprocal %186 {approx = true} : vector<1x16xf32> -> vector<1x16xf32>
    %191 = vector.broadcast %190 : vector<1x16xf32> to vector<32x16xf32>
    %192 = arith.mulf %189, %191 : vector<32x16xf32>
    %cst_40 = arith.constant dense<0.000000e+00> : vector<32x128xf32>
    %193 = tpu.matmul %192, %180, %cst_40 {dimension_numbers = #tpu.dot_dimension_numbers<[1], [0], [0], [1], [0, 0, 1, 1], [], []>} : vector<32x16xf32>, vector<16x128xf32>, vector<32x128xf32> -> vector<32x128xf32>
    %cst_41 = arith.constant 0.000000e+00 : f32
    %194 = vector.broadcast %cst_41 : f32 to vector<32x128xf32>
    %195 = arith.maximumf %177, %194 : vector<32x128xf32>
    %196 = arith.mulf %195, %193 : vector<32x128xf32>
    %c104 = arith.constant 104 : index
    %c0_42 = arith.constant 0 : index
    %197 = vector.load %arg1[%c104, %c0_42] : memref<392x128xf32, #tpu.memory_space<vmem>>, vector<32x32xf32>
    %c104_43 = arith.constant 104 : index
    %c32_44 = arith.constant 32 : index
    %198 = vector.load %arg1[%c104_43, %c32_44] : memref<392x128xf32, #tpu.memory_space<vmem>>, vector<32x1xf32>
    %cst_45 = arith.constant dense<0.000000e+00> : vector<32x128xf32>
    %199 = tpu.matmul %197, %196, %cst_45 {dimension_numbers = #tpu.dot_dimension_numbers<[1], [0], [0], [1], [0, 0, 1, 1], [], []>} : vector<32x32xf32>, vector<32x128xf32>, vector<32x128xf32> -> vector<32x128xf32>
    %200 = vector.broadcast %198 : vector<32x1xf32> to vector<32x128xf32>
    %201 = arith.addf %199, %200 : vector<32x128xf32>
    %202 = vector.broadcast %149 : vector<32x1xf32> to vector<32x128xf32>
    %203 = arith.mulf %202, %143 : vector<32x128xf32>
    %204 = arith.addf %201, %203 : vector<32x128xf32>
    %cst_46 = arith.constant dense<0.000000e+00> : vector<128xf32>
    %205 = vector.multi_reduction <add>, %204, %cst_46 [0] : vector<32x128xf32> to vector<128xf32>
    %206 = vector.shape_cast %205 : vector<128xf32> to vector<1x128xf32>
    %cst_47 = arith.constant 3.200000e+01 : f32
    %207 = vector.broadcast %cst_47 : f32 to vector<1x128xf32>
    %208 = arith.divf %206, %207 : vector<1x128xf32>
    %209 = vector.broadcast %208 : vector<1x128xf32> to vector<32x128xf32>
    %210 = arith.subf %204, %209 : vector<32x128xf32>
    %211 = arith.mulf %210, %210 : vector<32x128xf32>
    %cst_48 = arith.constant dense<0.000000e+00> : vector<128xf32>
    %212 = vector.multi_reduction <add>, %211, %cst_48 [0] : vector<32x128xf32> to vector<128xf32>
    %213 = vector.shape_cast %212 : vector<128xf32> to vector<1x128xf32>
    %cst_49 = arith.constant 3.200000e+01 : f32
    %214 = vector.broadcast %cst_49 : f32 to vector<1x128xf32>
    %215 = arith.divf %213, %214 : vector<1x128xf32>
    %cst_50 = arith.constant 9.99999974E-6 : f32
    %216 = vector.broadcast %cst_50 : f32 to vector<1x128xf32>
    %217 = arith.addf %215, %216 : vector<1x128xf32>
    %218 = math.rsqrt %217 : vector<1x128xf32>
    %219 = vector.broadcast %218 : vector<1x128xf32> to vector<32x128xf32>
    %220 = arith.mulf %210, %219 : vector<32x128xf32>
    %221 = vector.broadcast %147 : vector<32x1xf32> to vector<32x128xf32>
    %222 = arith.mulf %220, %221 : vector<32x128xf32>
    %223 = vector.broadcast %148 : vector<32x1xf32> to vector<32x128xf32>
    %224 = arith.addf %222, %223 : vector<32x128xf32>
    %c136 = arith.constant 136 : index
    %c0_51 = arith.constant 0 : index
    %225 = vector.load %arg1[%c136, %c0_51] : memref<392x128xf32, #tpu.memory_space<vmem>>, vector<32x32xf32>
    %c136_52 = arith.constant 136 : index
    %c32_53 = arith.constant 32 : index
    %226 = vector.load %arg1[%c136_52, %c32_53] : memref<392x128xf32, #tpu.memory_space<vmem>>, vector<32x1xf32>
    %cst_54 = arith.constant dense<0.000000e+00> : vector<32x128xf32>
    %227 = tpu.matmul %225, %224, %cst_54 {dimension_numbers = #tpu.dot_dimension_numbers<[1], [0], [0], [1], [0, 0, 1, 1], [], []>} : vector<32x32xf32>, vector<32x128xf32>, vector<32x128xf32> -> vector<32x128xf32>
    %228 = vector.broadcast %226 : vector<32x1xf32> to vector<32x128xf32>
    %229 = arith.addf %227, %228 : vector<32x128xf32>
    %cst_55 = arith.constant 5.000000e-01 : f32
    %230 = vector.broadcast %cst_55 : f32 to vector<32x128xf32>
    %231 = arith.mulf %230, %229 : vector<32x128xf32>
    %cst_56 = arith.constant 0.707106769 : f32
    %232 = vector.broadcast %cst_56 : f32 to vector<32x128xf32>
    %233 = arith.mulf %229, %232 : vector<32x128xf32>
    %234 = math.absf %233 : vector<32x128xf32>
    %cst_57 = arith.constant 0.327591091 : f32
    %235 = vector.broadcast %cst_57 : f32 to vector<32x128xf32>
    %236 = arith.mulf %235, %234 : vector<32x128xf32>
    %cst_58 = arith.constant 1.000000e+00 : f32
    %237 = vector.broadcast %cst_58 : f32 to vector<32x128xf32>
    %238 = arith.addf %237, %236 : vector<32x128xf32>
    %cst_59 = arith.constant 1.000000e+00 : f32
    %239 = vector.broadcast %cst_59 : f32 to vector<32x128xf32>
    %240 = arith.divf %239, %238 : vector<32x128xf32>
    %cst_60 = arith.constant 1.06140542 : f32
    %241 = vector.broadcast %cst_60 : f32 to vector<32x128xf32>
    %242 = arith.mulf %240, %241 : vector<32x128xf32>
    %cst_61 = arith.constant -1.45315206 : f32
    %243 = vector.broadcast %cst_61 : f32 to vector<32x128xf32>
    %244 = arith.addf %243, %242 : vector<32x128xf32>
    %245 = arith.mulf %240, %244 : vector<32x128xf32>
    %cst_62 = arith.constant 1.42141378 : f32
    %246 = vector.broadcast %cst_62 : f32 to vector<32x128xf32>
    %247 = arith.addf %246, %245 : vector<32x128xf32>
    %248 = arith.mulf %240, %247 : vector<32x128xf32>
    %cst_63 = arith.constant -0.284496725 : f32
    %249 = vector.broadcast %cst_63 : f32 to vector<32x128xf32>
    %250 = arith.addf %249, %248 : vector<32x128xf32>
    %251 = arith.mulf %240, %250 : vector<32x128xf32>
    %cst_64 = arith.constant 0.254829586 : f32
    %252 = vector.broadcast %cst_64 : f32 to vector<32x128xf32>
    %253 = arith.addf %252, %251 : vector<32x128xf32>
    %254 = arith.mulf %240, %253 : vector<32x128xf32>
    %cst_65 = arith.constant 0.000000e+00 : f32
    %255 = vector.broadcast %cst_65 : f32 to vector<32x128xf32>
    %256 = arith.subf %255, %234 : vector<32x128xf32>
    %257 = arith.mulf %256, %234 : vector<32x128xf32>
    %258 = math.exp %257 : vector<32x128xf32>
    %259 = arith.mulf %254, %258 : vector<32x128xf32>
    %cst_66 = arith.constant 1.000000e+00 : f32
    %260 = vector.broadcast %cst_66 : f32 to vector<32x128xf32>
    %261 = arith.subf %260, %259 : vector<32x128xf32>
    %cst_67 = arith.constant 0.000000e+00 : f32
    %262 = vector.broadcast %cst_67 : f32 to vector<32x128xf32>
    %263 = arith.cmpf oge, %233, %262 : vector<32x128xf32>
    %cst_68 = arith.constant 0.000000e+00 : f32
    %264 = vector.broadcast %cst_68 : f32 to vector<32x128xf32>
    %265 = arith.subf %264, %261 : vector<32x128xf32>
    %266 = arith.select %263, %261, %265 : vector<32x128xi1>, vector<32x128xf32>
    %cst_69 = arith.constant 1.000000e+00 : f32
    %267 = vector.broadcast %cst_69 : f32 to vector<32x128xf32>
    %268 = arith.addf %267, %266 : vector<32x128xf32>
    %269 = arith.mulf %231, %268 : vector<32x128xf32>
    %c168 = arith.constant 168 : index
    %c0_70 = arith.constant 0 : index
    %270 = vector.load %arg1[%c168, %c0_70] : memref<392x128xf32, #tpu.memory_space<vmem>>, vector<32x32xf32>
    %c168_71 = arith.constant 168 : index
    %c32_72 = arith.constant 32 : index
    %271 = vector.load %arg1[%c168_71, %c32_72] : memref<392x128xf32, #tpu.memory_space<vmem>>, vector<32x1xf32>
    %cst_73 = arith.constant dense<0.000000e+00> : vector<32x128xf32>
    %272 = tpu.matmul %270, %269, %cst_73 {dimension_numbers = #tpu.dot_dimension_numbers<[1], [0], [0], [1], [0, 0, 1, 1], [], []>} : vector<32x32xf32>, vector<32x128xf32>, vector<32x128xf32> -> vector<32x128xf32>
    %273 = vector.broadcast %271 : vector<32x1xf32> to vector<32x128xf32>
    %274 = arith.addf %272, %273 : vector<32x128xf32>
    %275 = vector.broadcast %150 : vector<32x1xf32> to vector<32x128xf32>
    %276 = arith.mulf %275, %204 : vector<32x128xf32>
    %277 = arith.addf %274, %276 : vector<32x128xf32>
    %c0_74 = arith.constant 0 : index
    %c0_75 = arith.constant 0 : index
    %278 = vector.load %arg2[%c0_74, %c0_75] : memref<32x128xf32, #tpu.memory_space<vmem>>, vector<32x128xf32>
    tpu.vector_store %arg2[%c0_74, %c0_75], %277 {strides = array<i32>} : memref<32x128xf32, #tpu.memory_space<vmem>>, vector<32x128xf32>,
    return
  }
}

</mosaic_0001>

<llo_original>
// kernel: lfel_forward.1
$region0: #{lfel_forward.1}
  #allocation0 [shape = 'u32[]', space=smem, size = 0x4, offset = 0x4, fixed_abs, tag = 'smem constant byte address 0x4 - core index']
  #allocation1 [shape = 'u32[144,128]{1,0:T(1,128)}', space=vmem, size = 0x12000, scoped, tag = 'internal scratch']
  %s0 = inlined_call_operand.vmem [shape: f32[4,260], index: 0, kind: input, shape index: {}]
  %s1 = inlined_call_operand.vmem [shape: f32[392,128], index: 1, kind: input, shape index: {}]
  %s2 = inlined_call_operand.vmem [shape: f32[32,128], index: 2, kind: output, shape index: {}]
  %s3 = sld [smem:[#allocation0]]
  $region18: #{lfel_forward.1} parent=0
    _
  %s5 = ssub.s32 1, %s3
  %s6 = scalar_select 0, %s5, %s3
  // Predicated region
  $region2: #{lfel_forward.1} parent=0 // pred_check
    _
  $region3: #{lfel_forward.1} parent=0 // pred_check_branch
    %8 = sbr.rel (0) target = $region5
  $region4: #{lfel_forward.1} parent=0 // pred_region
    _
  $region5: #{lfel_forward.1} parent=0 // pred_fallthru
    _
  // Predicated region
  $region6: #{lfel_forward.1} parent=0 // pred_check
    _
  $region7: #{lfel_forward.1} parent=0 // pred_check_branch
    %10 = sbr.rel (0) target = $region9
  $region8: #{lfel_forward.1} parent=0 // pred_region
    _
  $region9: #{lfel_forward.1} parent=0 // pred_fallthru
    _
  %v11 = vld [vmem:[%s1] sm:$0xff]
  %v12 = vld [vmem:[%s1 + $0x8] sm:$0xff]
  %v13 = vld [vmem:[%s1 + $0x10] sm:$0xff]
  %v14 = vld [vmem:[%s1 + $0x18] sm:$0xff]
  %v15 = vld [vmem:[%s0] sm:$0xff]
  %v16 = vld [vmem:[%s0 + $0x8] sm:$0xf]
  %18 = vset.pattern.permute.xlu0 4
  %19 = vperm.xlu0 %18, %v11
  %v20 = vpop.permute.xlu0 %19
  %23 = vset.pattern.permute.xlu0 4
  %24 = vperm.xlu0 %23, %v12
  %v25 = vpop.permute.xlu0 %24
  %28 = vset.pattern.permute.xlu0 4
  %29 = vperm.xlu0 %28, %v13
  %v30 = vpop.permute.xlu0 %29
  %33 = vset.pattern.permute.xlu0 4
  %34 = vperm.xlu0 %33, %v14
  %v35 = vpop.permute.xlu0 %34
  %v39 = vcombine.high %v15, %v15
  %vm40 = vcmask 31744
  %v41 = vsel %vm40, %v11, 0
  %v43 = vsel %vm40, %v12, 0
  %v45 = vsel %vm40, %v13, 0
  %v47 = vsel %vm40, %v14, 0
  %vm49 = vcmask 1043456
  %v50 = vsel %vm49, %v15, 0
  %v52 = vsel %vm49, %v39, 0
  %v54 = vsel %vm49, %v16, 0
  %56 = vmatprep.subr.mxu0 %v52
  %57 = vmatpush1.msra.mxu0 %v50
  %58 = vmatprep.subr.mxu0 0.0
  %59 = vmatpush1.msra.mxu0 0.0
  %60 = vmatprep.subr.mxu0 0.0
  %61 = vmatpush1.msra.mxu0 0.0
  %62 = vmatprep.subr.mxu0 0.0
  %63 = vmatpush1.msra.mxu0 0.0
  %64 = vmatprep.subr.mxu0 0.0
  %65 = vmatpush1.msra.mxu0 0.0
  %66 = vmatprep.subr.mxu0 0.0
  %67 = vmatpush1.msra.mxu0 0.0
  %68 = vmatprep.subr.mxu0 0.0
  %69 = vmatpush1.msra.mxu0 0.0
  %70 = vmatprep.subr.mxu0 0.0
  %71 = vmatpush1.msra.mxu0 0.0
  %72 = vmatprep.subr.mxu0 0.0
  %73 = vmatpush1.msra.mxu0 0.0
  %74 = vmatprep.subr.mxu0 0.0
  %75 = vmatpush1.msra.mxu0 0.0
  %76 = vmatprep.subr.mxu0 0.0
  %77 = vmatpush1.msra.mxu0 0.0
  %78 = vmatprep.subr.mxu0 0.0
  %79 = vmatpush1.msra.mxu0 0.0
  %80 = vmatprep.subr.mxu0 0.0
  %81 = vmatpush1.msra.mxu0 0.0
  %82 = vmatprep.subr.mxu0 0.0
  %83 = vmatpush1.msra.mxu0 0.0
  %84 = vmatprep.subr.mxu0 0.0
  %85 = vmatpush1.msra.mxu0 0.0
  %86 = vmatprep.subr.mxu0 0.0
  %87 = vmatpush1.msra.mxu0 0.0
  %88 = vmatprep.subr.mxu0 0.0
  %89 = vmatpush1.msra.mxu0 0.0
  %90 = vmatprep.subr.mxu0 0.0
  %91 = vmatpush1.msra.mxu0 0.0
  %92 = vmatprep.subr.mxu0 0.0
  %93 = vmatpush1.msra.mxu0 0.0
  %94 = vmatprep.subr.mxu0 0.0
  %95 = vmatpush1.msra.mxu0 0.0
  %96 = vmatprep.subr.mxu0 0.0
  %97 = vmatpush1.msra.mxu0 0.0
  %98 = vmatprep.subr.mxu0 0.0
  %99 = vmatpush1.msra.mxu0 0.0
  %100 = vmatprep.subr.mxu0 0.0
  %101 = vmatpush1.msra.mxu0 0.0
  %102 = vmatprep.subr.mxu0 0.0
  %103 = vmatpush1.msra.mxu0 0.0
  %104 = vmatprep.subr.mxu0 0.0
  %105 = vmatpush1.msra.mxu0 0.0
  %106 = vmatprep.subr.mxu0 0.0
  %107 = vmatpush1.msra.mxu0 0.0
  %108 = vmatprep.subr.mxu0 0.0
  %109 = vmatpush1.msra.mxu0 0.0
  %110 = vmatprep.subr.mxu0 0.0
  %111 = vmatpush1.msra.mxu0 0.0
  %112 = vmatprep.subr.mxu0 0.0
  %113 = vmatpush1.msra.mxu0 0.0
  %114 = vmatprep.subr.mxu0 0.0
  %115 = vmatpush1.msra.mxu0 0.0
  %116 = vmatprep.subr.mxu0 0.0
  %117 = vmatpush1.msra.mxu0 0.0
  %118 = vmatprep.subr.mxu0 0.0
  %119 = vmatpush1.msra.mxu0 0.0
  %120 = vmatprep.mubr.f32.mxu0 0.0
  %121 = vmatmul.mubr.f32.gmra.mrb[0].mxu0 %v41
  %v122 = vpop.f32.mrb[0].mxu0
  %v123 = vadd.f32 %v20, %v122
  %v124 = vpop.f32.mrb[0].mxu0
  %v125 = vadd.f32 %v20, %v124
  %126 = vmatprep.mubr.f32.mxu0 0.0
  %127 = vmatmul.mubr.f32.gmra.mrb[0].mxu0 %v43
  %v128 = vpop.f32.mrb[0].mxu0
  %v129 = vadd.f32 %v25, %v128
  %v130 = vpop.f32.mrb[0].mxu0
  %v131 = vadd.f32 %v25, %v130
  %132 = vmatprep.mubr.f32.mxu0 0.0
  %133 = vmatmul.mubr.f32.gmra.mrb[0].mxu0 %v45
  %v134 = vpop.f32.mrb[0].mxu0
  %v135 = vadd.f32 %v30, %v134
  %v136 = vpop.f32.mrb[0].mxu0
  %v137 = vadd.f32 %v30, %v136
  %138 = vmatprep.mubr.f32.mxu0 0.0
  %139 = vmatmul.mubr.f32.gmra.mrb[0].mxu0 %v47
  %v140 = vpop.f32.mrb[0].mxu0
  %v141 = vadd.f32 %v35, %v140
  %v142 = vpop.f32.mrb[0].mxu0
  %v143 = vadd.f32 %v35, %v142
  %144 = vdwg.mxu0
  %145 = vmatprep.subr.mxu0 0.0
  %146 = vmatpush1.msra.mxu0 %v54
  %147 = vmatprep.subr.mxu0 0.0
  %148 = vmatpush1.msra.mxu0 0.0
  %149 = vmatprep.subr.mxu0 0.0
  %150 = vmatpush1.msra.mxu0 0.0
  %151 = vmatprep.subr.mxu0 0.0
  %152 = vmatpush1.msra.mxu0 0.0
  %153 = vmatprep.subr.mxu0 0.0
  %154 = vmatpush1.msra.mxu0 0.0
  %155 = vmatprep.subr.mxu0 0.0
  %156 = vmatpush1.msra.mxu0 0.0
  %157 = vmatprep.subr.mxu0 0.0
  %158 = vmatpush1.msra.mxu0 0.0
  %159 = vmatprep.subr.mxu0 0.0
  %160 = vmatpush1.msra.mxu0 0.0
  %161 = vmatprep.subr.mxu0 0.0
  %162 = vmatpush1.msra.mxu0 0.0
  %163 = vmatprep.subr.mxu0 0.0
  %164 = vmatpush1.msra.mxu0 0.0
  %165 = vmatprep.subr.mxu0 0.0
  %166 = vmatpush1.msra.mxu0 0.0
  %167 = vmatprep.subr.mxu0 0.0
  %168 = vmatpush1.msra.mxu0 0.0
  %169 = vmatprep.subr.mxu0 0.0
  %170 = vmatpush1.msra.mxu0 0.0
  %171 = vmatprep.subr.mxu0 0.0
  %172 = vmatpush1.msra.mxu0 0.0
  %173 = vmatprep.subr.mxu0 0.0
  %174 = vmatpush1.msra.mxu0 0.0
  %175 = vmatprep.subr.mxu0 0.0
  %176 = vmatpush1.msra.mxu0 0.0
  %177 = vmatprep.subr.mxu0 0.0
  %178 = vmatpush1.msra.mxu0 0.0
  %179 = vmatprep.subr.mxu0 0.0
  %180 = vmatpush1.msra.mxu0 0.0
  %181 = vmatprep.subr.mxu0 0.0
  %182 = vmatpush1.msra.mxu0 0.0
  %183 = vmatprep.subr.mxu0 0.0
  %184 = vmatpush1.msra.mxu0 0.0
  %185 = vmatprep.subr.mxu0 0.0
  %186 = vmatpush1.msra.mxu0 0.0
  %187 = vmatprep.subr.mxu0 0.0
  %188 = vmatpush1.msra.mxu0 0.0
  %189 = vmatprep.subr.mxu0 0.0
  %190 = vmatpush1.msra.mxu0 0.0
  %191 = vmatprep.subr.mxu0 0.0
  %192 = vmatpush1.msra.mxu0 0.0
  %193 = vmatprep.subr.mxu0 0.0
  %194 = vmatpush1.msra.mxu0 0.0
  %195 = vmatprep.subr.mxu0 0.0
  %196 = vmatpush1.msra.mxu0 0.0
  %197 = vmatprep.subr.mxu0 0.0
  %198 = vmatpush1.msra.mxu0 0.0
  %199 = vmatprep.subr.mxu0 0.0
  %200 = vmatpush1.msra.mxu0 0.0
  %201 = vmatprep.subr.mxu0 0.0
  %202 = vmatpush1.msra.mxu0 0.0
  %203 = vmatprep.subr.mxu0 0.0
  %204 = vmatpush1.msra.mxu0 0.0
  %205 = vmatprep.subr.mxu0 0.0
  %206 = vmatpush1.msra.mxu0 0.0
  %207 = vmatprep.subr.mxu0 0.0
  %208 = vmatpush1.msra.mxu0 0.0
  %209 = vmatprep.mubr.f32.mxu0 0.0
  %210 = vmatmul.mubr.f32.gmra.mrb[0].mxu0 %v41
  %v211 = vpop.f32.mrb[0].mxu0
  %v212 = vadd.f32 %v20, %v211
  %v213 = vpop.f32.mrb[0].mxu0
  %214 = vmatprep.mubr.f32.mxu0 0.0
  %215 = vmatmul.mubr.f32.gmra.mrb[0].mxu0 %v43
  %v216 = vpop.f32.mrb[0].mxu0
  %v217 = vadd.f32 %v25, %v216
  %v218 = vpop.f32.mrb[0].mxu0
  %219 = vmatprep.mubr.f32.mxu0 0.0
  %220 = vmatmul.mubr.f32.gmra.mrb[0].mxu0 %v45
  %v221 = vpop.f32.mrb[0].mxu0
  %v222 = vadd.f32 %v30, %v221
  %v223 = vpop.f32.mrb[0].mxu0
  %224 = vmatprep.mubr.f32.mxu0 0.0
  %225 = vmatmul.mubr.f32.gmra.mrb[0].mxu0 %v47
  %v226 = vpop.f32.mrb[0].mxu0
  %v227 = vadd.f32 %v35, %v226
  %v228 = vpop.f32.mrb[0].mxu0
  %229 = vdwg.mxu0
  %v230 = vld [vmem:[%s1 + $0xe8] sm:$0xff]
  %v231 = vld [vmem:[%s1 + $0xf0] sm:$0x1]
  %v232 = vlaneseq
  %v233 = vshrl.u32 %v232, 7
  %v234 = vsub.s32 0, %v233
  %v235 = vrot.slane %v230, %v234
  %v236 = vmul.f32 %v123, %v235
  %v237 = vmul.f32 %v129, %v235
  %v238 = vmul.f32 %v135, %v235
  %v239 = vmul.f32 %v141, %v235
  %240 = vset.pattern.permute.xlu0 5
  %241 = vperm.xlu0 %240, %v11
  %v242 = vpop.permute.xlu0 %241
  %244 = vset.pattern.permute.xlu0 5
  %245 = vperm.xlu0 %244, %v12
  %v246 = vpop.permute.xlu0 %245
  %248 = vset.pattern.permute.xlu0 5
  %249 = vperm.xlu0 %248, %v13
  %v250 = vpop.permute.xlu0 %249
  %252 = vset.pattern.permute.xlu0 5
  %253 = vperm.xlu0 %252, %v14
  %v254 = vpop.permute.xlu0 %253
  %v256 = vmul.f32 %v236, %v242
  %v257 = vmul.f32 %v237, %v246
  %v258 = vmul.f32 %v238, %v250
  %v259 = vmul.f32 %v239, %v254
  %v260 = vadd.f32 %v256, 0.0
  %v261 = vadd.f32 %v257, 0.0
  %v262 = vadd.f32 %v258, 0.0
  %v263 = vadd.f32 %v259, 0.0
  %v264 = vlaneseq
  %v265 = vshrl.u32 %v264, 7
  %v266 = vsub.s32 1, %v265
  %v267 = vrot.slane %v230, %v266
  %v268 = vmul.f32 %v125, %v267
  %v269 = vmul.f32 %v131, %v267
  %v270 = vmul.f32 %v137, %v267
  %v271 = vmul.f32 %v143, %v267
  %272 = vset.pattern.permute.xlu0 6
  %273 = vperm.xlu0 %272, %v11
  %v274 = vpop.permute.xlu0 %273
  %276 = vset.pattern.permute.xlu0 6
  %277 = vperm.xlu0 %276, %v12
  %v278 = vpop.permute.xlu0 %277
  %280 = vset.pattern.permute.xlu0 6
  %281 = vperm.xlu0 %280, %v13
  %v282 = vpop.permute.xlu0 %281
  %284 = vset.pattern.permute.xlu0 6
  %285 = vperm.xlu0 %284, %v14
  %v286 = vpop.permute.xlu0 %285
  %v288 = vmul.f32 %v268, %v274
  %v289 = vmul.f32 %v269, %v278
  %v290 = vmul.f32 %v270, %v282
  %v291 = vmul.f32 %v271, %v286
  %v292 = vadd.f32 %v260, %v288
  %v293 = vadd.f32 %v261, %v289
  %v294 = vadd.f32 %v262, %v290
  %v295 = vadd.f32 %v263, %v291
  %v296 = vlaneseq
  %v297 = vshrl.u32 %v296, 7
  %v298 = vsub.s32 2, %v297
  %v299 = vrot.slane %v230, %v298
  %301 = vrot.lane.b32.xlu0 %v299, 1
  %v302 = vpop.permute.xlu0 %301
  %v304 = vmul.f32 %v123, %v302
  %v305 = vmul.f32 %v125, %v302
  %v306 = vmul.f32 %v129, %v302
  %v307 = vmul.f32 %v131, %v302
  %v308 = vmul.f32 %v135, %v302
  %v309 = vmul.f32 %v137, %v302
  %v310 = vmul.f32 %v141, %v302
  %v311 = vmul.f32 %v143, %v302
  %312 = vset.pattern.permute.xlu0 7
  %313 = vperm.xlu0 %312, %v11
  %v314 = vpop.permute.xlu0 %313
  %316 = vset.pattern.permute.xlu0 7
  %317 = vperm.xlu0 %316, %v12
  %v318 = vpop.permute.xlu0 %317
  %320 = vset.pattern.permute.xlu0 7
  %321 = vperm.xlu0 %320, %v13
  %v322 = vpop.permute.xlu0 %321
  %324 = vset.pattern.permute.xlu0 7
  %325 = vperm.xlu0 %324, %v14
  %v326 = vpop.permute.xlu0 %325
  %v328 = vmul.f32 %v304, %v314
  %v329 = vmul.f32 %v305, %v314
  %v330 = vmul.f32 %v306, %v318
  %v331 = vmul.f32 %v307, %v318
  %v332 = vmul.f32 %v308, %v322
  %v333 = vmul.f32 %v309, %v322
  %v334 = vmul.f32 %v310, %v326
  %v335 = vmul.f32 %v311, %v326
  %344 = vrot.lane.b32.xlu0 %v328, 127
  %v345 = vpop.permute.xlu0 %344
  %346 = vrot.lane.b32.xlu0 %v329, 127
  %v347 = vpop.permute.xlu0 %346
  %348 = vrot.lane.b32.xlu0 %v330, 127
  %v349 = vpop.permute.xlu0 %348
  %350 = vrot.lane.b32.xlu0 %v331, 127
  %v351 = vpop.permute.xlu0 %350
  %352 = vrot.lane.b32.xlu0 %v332, 127
  %v353 = vpop.permute.xlu0 %352
  %354 = vrot.lane.b32.xlu0 %v333, 127
  %v355 = vpop.permute.xlu0 %354
  %356 = vrot.lane.b32.xlu0 %v334, 127
  %v357 = vpop.permute.xlu0 %356
  %358 = vrot.lane.b32.xlu0 %v335, 127
  %v359 = vpop.permute.xlu0 %358
  %vm360 = vcmask 1039360
  %v361 = vsel %vm360, %v345, %v347
  %v362 = vsel %vm360, %v349, %v351
  %v363 = vsel %vm360, %v353, %v355
  %v364 = vsel %vm360, %v357, %v359
  %v369 = vadd.f32 %v292, %v361
  %v370 = vadd.f32 %v293, %v362
  %v371 = vadd.f32 %v294, %v363
  %v372 = vadd.f32 %v295, %v364
  %v373 = vlaneseq
  %v374 = vshrl.u32 %v373, 7
  %v375 = vsub.s32 3, %v374
  %v376 = vrot.slane %v230, %v375
  %378 = vrot.lane.b32.xlu0 %v376, 1
  %v379 = vpop.permute.xlu0 %378
  %v381 = vmul.f32 %v125, %v379
  %v382 = vmul.f32 %v212, %v379
  %v383 = vmul.f32 %v131, %v379
  %v384 = vmul.f32 %v217, %v379
  %v385 = vmul.f32 %v137, %v379
  %v386 = vmul.f32 %v222, %v379
  %v387 = vmul.f32 %v143, %v379
  %v388 = vmul.f32 %v227, %v379
  %389 = vset.pattern.permute.xlu0 8
  %390 = vperm.xlu0 %389, %v11
  %v391 = vpop.permute.xlu0 %390
  %393 = vset.pattern.permute.xlu0 8
  %394 = vperm.xlu0 %393, %v12
  %v395 = vpop.permute.xlu0 %394
  %397 = vset.pattern.permute.xlu0 8
  %398 = vperm.xlu0 %397, %v13
  %v399 = vpop.permute.xlu0 %398
  %401 = vset.pattern.permute.xlu0 8
  %402 = vperm.xlu0 %401, %v14
  %v403 = vpop.permute.xlu0 %402
  %v405 = vmul.f32 %v381, %v391
  %v406 = vmul.f32 %v382, %v391
  %v407 = vmul.f32 %v383, %v395
  %v408 = vmul.f32 %v384, %v395
  %v409 = vmul.f32 %v385, %v399
  %v410 = vmul.f32 %v386, %v399
  %v411 = vmul.f32 %v387, %v403
  %v412 = vmul.f32 %v388, %v403
  %421 = vrot.lane.b32.xlu0 %v405, 127
  %v422 = vpop.permute.xlu0 %421
  %423 = vrot.lane.b32.xlu0 %v406, 127
  %v424 = vpop.permute.xlu0 %423
  %425 = vrot.lane.b32.xlu0 %v407, 127
  %v426 = vpop.permute.xlu0 %425
  %427 = vrot.lane.b32.xlu0 %v408, 127
  %v428 = vpop.permute.xlu0 %427
  %429 = vrot.lane.b32.xlu0 %v409, 127
  %v430 = vpop.permute.xlu0 %429
  %431 = vrot.lane.b32.xlu0 %v410, 127
  %v432 = vpop.permute.xlu0 %431
  %433 = vrot.lane.b32.xlu0 %v411, 127
  %v434 = vpop.permute.xlu0 %433
  %435 = vrot.lane.b32.xlu0 %v412, 127
  %v436 = vpop.permute.xlu0 %435
  %v437 = vsel %vm360, %v422, %v424
  %v438 = vsel %vm360, %v426, %v428
  %v439 = vsel %vm360, %v430, %v432
  %v440 = vsel %vm360, %v434, %v436
  %v445 = vadd.f32 %v369, %v437
  %v446 = vadd.f32 %v370, %v438
  %v447 = vadd.f32 %v371, %v439
  %v448 = vadd.f32 %v372, %v440
  %v449 = vlaneseq
  %v450 = vshrl.u32 %v449, 7
  %v451 = vsub.s32 4, %v450
  %v452 = vrot.slane %v230, %v451
  %454 = vrot.lane.b32.xlu0 %v452, 2
  %v455 = vpop.permute.xlu0 %454
  %v457 = vmul.f32 %v123, %v455
  %v458 = vmul.f32 %v125, %v455
  %v459 = vmul.f32 %v129, %v455
  %v460 = vmul.f32 %v131, %v455
  %v461 = vmul.f32 %v135, %v455
  %v462 = vmul.f32 %v137, %v455
  %v463 = vmul.f32 %v141, %v455
  %v464 = vmul.f32 %v143, %v455
  %465 = vset.pattern.permute.xlu0 9
  %466 = vperm.xlu0 %465, %v11
  %v467 = vpop.permute.xlu0 %466
  %469 = vset.pattern.permute.xlu0 9
  %470 = vperm.xlu0 %469, %v12
  %v471 = vpop.permute.xlu0 %470
  %473 = vset.pattern.permute.xlu0 9
  %474 = vperm.xlu0 %473, %v13
  %v475 = vpop.permute.xlu0 %474
  %477 = vset.pattern.permute.xlu0 9
  %478 = vperm.xlu0 %477, %v14
  %v479 = vpop.permute.xlu0 %478
  %v481 = vmul.f32 %v457, %v467
  %v482 = vmul.f32 %v458, %v467
  %v483 = vmul.f32 %v459, %v471
  %v484 = vmul.f32 %v460, %v471
  %v485 = vmul.f32 %v461, %v475
  %v486 = vmul.f32 %v462, %v475
  %v487 = vmul.f32 %v463, %v479
  %v488 = vmul.f32 %v464, %v479
  %497 = vrot.lane.b32.xlu0 %v481, 126
  %v498 = vpop.permute.xlu0 %497
  %499 = vrot.lane.b32.xlu0 %v482, 126
  %v500 = vpop.permute.xlu0 %499
  %501 = vrot.lane.b32.xlu0 %v483, 126
  %v502 = vpop.permute.xlu0 %501
  %503 = vrot.lane.b32.xlu0 %v484, 126
  %v504 = vpop.permute.xlu0 %503
  %505 = vrot.lane.b32.xlu0 %v485, 126
  %v506 = vpop.permute.xlu0 %505
  %507 = vrot.lane.b32.xlu0 %v486, 126
  %v508 = vpop.permute.xlu0 %507
  %509 = vrot.lane.b32.xlu0 %v487, 126
  %v510 = vpop.permute.xlu0 %509
  %511 = vrot.lane.b32.xlu0 %v488, 126
  %v512 = vpop.permute.xlu0 %511
  %vm513 = vcmask 1031168
  %v514 = vsel %vm513, %v498, %v500
  %v515 = vsel %vm513, %v502, %v504
  %v516 = vsel %vm513, %v506, %v508
  %v517 = vsel %vm513, %v510, %v512
  %v522 = vadd.f32 %v445, %v514
  %v523 = vadd.f32 %v446, %v515
  %v524 = vadd.f32 %v447, %v516
  %v525 = vadd.f32 %v448, %v517
  %v526 = vlaneseq
  %v527 = vshrl.u32 %v526, 7
  %v528 = vsub.s32 5, %v527
  %v529 = vrot.slane %v230, %v528
  %531 = vrot.lane.b32.xlu0 %v529, 2
  %v532 = vpop.permute.xlu0 %531
  %v534 = vmul.f32 %v125, %v532
  %v535 = vmul.f32 %v212, %v532
  %v536 = vmul.f32 %v131, %v532
  %v537 = vmul.f32 %v217, %v532
  %v538 = vmul.f32 %v137, %v532
  %v539 = vmul.f32 %v222, %v532
  %v540 = vmul.f32 %v143, %v532
  %v541 = vmul.f32 %v227, %v532
  %542 = vset.pattern.permute.xlu0 10
  %543 = vperm.xlu0 %542, %v11
  %v544 = vpop.permute.xlu0 %543
  %546 = vset.pattern.permute.xlu0 10
  %547 = vperm.xlu0 %546, %v12
  %v548 = vpop.permute.xlu0 %547
  %550 = vset.pattern.permute.xlu0 10
  %551 = vperm.xlu0 %550, %v13
  %v552 = vpop.permute.xlu0 %551
  %554 = vset.pattern.permute.xlu0 10
  %555 = vperm.xlu0 %554, %v14
  %v556 = vpop.permute.xlu0 %555
  %v558 = vmul.f32 %v534, %v544
  %v559 = vmul.f32 %v535, %v544
  %v560 = vmul.f32 %v536, %v548
  %v561 = vmul.f32 %v537, %v548
  %v562 = vmul.f32 %v538, %v552
  %v563 = vmul.f32 %v539, %v552
  %v564 = vmul.f32 %v540, %v556
  %v565 = vmul.f32 %v541, %v556
  %574 = vrot.lane.b32.xlu0 %v558, 126
  %v575 = vpop.permute.xlu0 %574
  %576 = vrot.lane.b32.xlu0 %v559, 126
  %v577 = vpop.permute.xlu0 %576
  %578 = vrot.lane.b32.xlu0 %v560, 126
  %v579 = vpop.permute.xlu0 %578
  %580 = vrot.lane.b32.xlu0 %v561, 126
  %v581 = vpop.permute.xlu0 %580
  %582 = vrot.lane.b32.xlu0 %v562, 126
  %v583 = vpop.permute.xlu0 %582
  %584 = vrot.lane.b32.xlu0 %v563, 126
  %v585 = vpop.permute.xlu0 %584
  %586 = vrot.lane.b32.xlu0 %v564, 126
  %v587 = vpop.permute.xlu0 %586
  %588 = vrot.lane.b32.xlu0 %v565, 126
  %v589 = vpop.permute.xlu0 %588
  %v590 = vsel %vm513, %v575, %v577
  %v591 = vsel %vm513, %v579, %v581
  %v592 = vsel %vm513, %v583, %v585
  %v593 = vsel %vm513, %v587, %v589
  %v598 = vadd.f32 %v522, %v590
  %v599 = vadd.f32 %v523, %v591
  %v600 = vadd.f32 %v524, %v592
  %v601 = vadd.f32 %v525, %v593
  %v602 = vlaneseq
  %v603 = vshrl.u32 %v602, 7
  %v604 = vsub.s32 6, %v603
  %v605 = vrot.slane %v230, %v604
  %607 = vrot.lane.b32.xlu0 %v605, 3
  %v608 = vpop.permute.xlu0 %607
  %v610 = vmul.f32 %v123, %v608
  %v611 = vmul.f32 %v125, %v608
  %v612 = vmul.f32 %v129, %v608
  %v613 = vmul.f32 %v131, %v608
  %v614 = vmul.f32 %v135, %v608
  %v615 = vmul.f32 %v137, %v608
  %v616 = vmul.f32 %v141, %v608
  %v617 = vmul.f32 %v143, %v608
  %618 = vset.pattern.permute.xlu0 11
  %619 = vperm.xlu0 %618, %v11
  %v620 = vpop.permute.xlu0 %619
  %622 = vset.pattern.permute.xlu0 11
  %623 = vperm.xlu0 %622, %v12
  %v624 = vpop.permute.xlu0 %623
  %626 = vset.pattern.permute.xlu0 11
  %627 = vperm.xlu0 %626, %v13
  %v628 = vpop.permute.xlu0 %627
  %630 = vset.pattern.permute.xlu0 11
  %631 = vperm.xlu0 %630, %v14
  %v632 = vpop.permute.xlu0 %631
  %v634 = vmul.f32 %v610, %v620
  %v635 = vmul.f32 %v611, %v620
  %v636 = vmul.f32 %v612, %v624
  %v637 = vmul.f32 %v613, %v624
  %v638 = vmul.f32 %v614, %v628
  %v639 = vmul.f32 %v615, %v628
  %v640 = vmul.f32 %v616, %v632
  %v641 = vmul.f32 %v617, %v632
  %650 = vrot.lane.b32.xlu0 %v634, 125
  %v651 = vpop.permute.xlu0 %650
  %652 = vrot.lane.b32.xlu0 %v635, 125
  %v653 = vpop.permute.xlu0 %652
  %654 = vrot.lane.b32.xlu0 %v636, 125
  %v655 = vpop.permute.xlu0 %654
  %656 = vrot.lane.b32.xlu0 %v637, 125
  %v657 = vpop.permute.xlu0 %656
  %658 = vrot.lane.b32.xlu0 %v638, 125
  %v659 = vpop.permute.xlu0 %658
  %660 = vrot.lane.b32.xlu0 %v639, 125
  %v661 = vpop.permute.xlu0 %660
  %662 = vrot.lane.b32.xlu0 %v640, 125
  %v663 = vpop.permute.xlu0 %662
  %664 = vrot.lane.b32.xlu0 %v641, 125
  %v665 = vpop.permute.xlu0 %664
  %vm666 = vcmask 1022976
  %v667 = vsel %vm666, %v651, %v653
  %v668 = vsel %vm666, %v655, %v657
  %v669 = vsel %vm666, %v659, %v661
  %v670 = vsel %vm666, %v663, %v665
  %v675 = vadd.f32 %v598, %v667
  %v676 = vadd.f32 %v599, %v668
  %v677 = vadd.f32 %v600, %v669
  %v678 = vadd.f32 %v601, %v670
  %v679 = vlaneseq
  %v680 = vshrl.u32 %v679, 7
  %v681 = vsub.s32 7, %v680
  %v682 = vrot.slane %v230, %v681
  %684 = vrot.lane.b32.xlu0 %v682, 3
  %v685 = vpop.permute.xlu0 %684
  %v687 = vmul.f32 %v125, %v685
  %v688 = vmul.f32 %v212, %v685
  %v689 = vmul.f32 %v131, %v685
  %v690 = vmul.f32 %v217, %v685
  %v691 = vmul.f32 %v137, %v685
  %v692 = vmul.f32 %v222, %v685
  %v693 = vmul.f32 %v143, %v685
  %v694 = vmul.f32 %v227, %v685
  %695 = vset.pattern.permute.xlu0 12
  %696 = vperm.xlu0 %695, %v11
  %v697 = vpop.permute.xlu0 %696
  %699 = vset.pattern.permute.xlu0 12
  %700 = vperm.xlu0 %699, %v12
  %v701 = vpop.permute.xlu0 %700
  %703 = vset.pattern.permute.xlu0 12
  %704 = vperm.xlu0 %703, %v13
  %v705 = vpop.permute.xlu0 %704
  %707 = vset.pattern.permute.xlu0 12
  %708 = vperm.xlu0 %707, %v14
  %v709 = vpop.permute.xlu0 %708
  %v711 = vmul.f32 %v687, %v697
  %v712 = vmul.f32 %v688, %v697
  %v713 = vmul.f32 %v689, %v701
  %v714 = vmul.f32 %v690, %v701
  %v715 = vmul.f32 %v691, %v705
  %v716 = vmul.f32 %v692, %v705
  %v717 = vmul.f32 %v693, %v709
  %v718 = vmul.f32 %v694, %v709
  %727 = vrot.lane.b32.xlu0 %v711, 125
  %v728 = vpop.permute.xlu0 %727
  %729 = vrot.lane.b32.xlu0 %v712, 125
  %v730 = vpop.permute.xlu0 %729
  %731 = vrot.lane.b32.xlu0 %v713, 125
  %v732 = vpop.permute.xlu0 %731
  %733 = vrot.lane.b32.xlu0 %v714, 125
  %v734 = vpop.permute.xlu0 %733
  %735 = vrot.lane.b32.xlu0 %v715, 125
  %v736 = vpop.permute.xlu0 %735
  %737 = vrot.lane.b32.xlu0 %v716, 125
  %v738 = vpop.permute.xlu0 %737
  %739 = vrot.lane.b32.xlu0 %v717, 125
  %v740 = vpop.permute.xlu0 %739
  %741 = vrot.lane.b32.xlu0 %v718, 125
  %v742 = vpop.permute.xlu0 %741
  %v743 = vsel %vm666, %v728, %v730
  %v744 = vsel %vm666, %v732, %v734
  %v745 = vsel %vm666, %v736, %v738
  %v746 = vsel %vm666, %v740, %v742
  %v751 = vadd.f32 %v675, %v743
  %v752 = vadd.f32 %v676, %v744
  %v753 = vadd.f32 %v677, %v745
  %v754 = vadd.f32 %v678, %v746
  %v755 = vlaneseq
  %v756 = vshrl.u32 %v755, 7
  %v757 = vsub.s32 0, %v756
  %v758 = vrot.slane %v231, %v757
  %760 = vrot.lane.b32.xlu0 %v758, 4
  %v761 = vpop.permute.xlu0 %760
  %v763 = vmul.f32 %v123, %v761
  %v764 = vmul.f32 %v125, %v761
  %v765 = vmul.f32 %v129, %v761
  %v766 = vmul.f32 %v131, %v761
  %v767 = vmul.f32 %v135, %v761
  %v768 = vmul.f32 %v137, %v761
  %v769 = vmul.f32 %v141, %v761
  %v770 = vmul.f32 %v143, %v761
  %771 = vset.pattern.permute.xlu0 13
  %772 = vperm.xlu0 %771, %v11
  %v773 = vpop.permute.xlu0 %772
  %775 = vset.pattern.permute.xlu0 13
  %776 = vperm.xlu0 %775, %v12
  %v777 = vpop.permute.xlu0 %776
  %779 = vset.pattern.permute.xlu0 13
  %780 = vperm.xlu0 %779, %v13
  %v781 = vpop.permute.xlu0 %780
  %783 = vset.pattern.permute.xlu0 13
  %784 = vperm.xlu0 %783, %v14
  %v785 = vpop.permute.xlu0 %784
  %v787 = vmul.f32 %v763, %v773
  %v788 = vmul.f32 %v764, %v773
  %v789 = vmul.f32 %v765, %v777
  %v790 = vmul.f32 %v766, %v777
  %v791 = vmul.f32 %v767, %v781
  %v792 = vmul.f32 %v768, %v781
  %v793 = vmul.f32 %v769, %v785
  %v794 = vmul.f32 %v770, %v785
  %803 = vrot.lane.b32.xlu0 %v787, 124
  %v804 = vpop.permute.xlu0 %803
  %805 = vrot.lane.b32.xlu0 %v788, 124
  %v806 = vpop.permute.xlu0 %805
  %807 = vrot.lane.b32.xlu0 %v789, 124
  %v808 = vpop.permute.xlu0 %807
  %809 = vrot.lane.b32.xlu0 %v790, 124
  %v810 = vpop.permute.xlu0 %809
  %811 = vrot.lane.b32.xlu0 %v791, 124
  %v812 = vpop.permute.xlu0 %811
  %813 = vrot.lane.b32.xlu0 %v792, 124
  %v814 = vpop.permute.xlu0 %813
  %815 = vrot.lane.b32.xlu0 %v793, 124
  %v816 = vpop.permute.xlu0 %815
  %817 = vrot.lane.b32.xlu0 %v794, 124
  %v818 = vpop.permute.xlu0 %817
  %vm819 = vcmask 1014784
  %v820 = vsel %vm819, %v804, %v806
  %v821 = vsel %vm819, %v808, %v810
  %v822 = vsel %vm819, %v812, %v814
  %v823 = vsel %vm819, %v816, %v818
  %v828 = vadd.f32 %v751, %v820
  %v829 = vadd.f32 %v752, %v821
  %v830 = vadd.f32 %v753, %v822
  %v831 = vadd.f32 %v754, %v823
  %832 = vadd.xlane.f32.xlu0 %v828
  %v833 = vpop.xlane.xlu0 %832
  %834 = vadd.xlane.f32.xlu0 %v829
  %v835 = vpop.xlane.xlu0 %834
  %836 = vadd.xlane.f32.xlu0 %v830
  %v837 = vpop.xlane.xlu0 %836
  %838 = vadd.xlane.f32.xlu0 %v831
  %v839 = vpop.xlane.xlu0 %838
  %v840 = vmul.f32 %v833, 0.0078125
  %v841 = vmul.f32 %v835, 0.0078125
  %v842 = vmul.f32 %v837, 0.0078125
  %v843 = vmul.f32 %v839, 0.0078125
  %v844 = vsub.f32 %v828, %v840
  %v845 = vsub.f32 %v829, %v841
  %v846 = vsub.f32 %v830, %v842
  %v847 = vsub.f32 %v831, %v843
  %v848 = vmul.f32 %v844, %v844
  %v849 = vmul.f32 %v845, %v845
  %v850 = vmul.f32 %v846, %v846
  %v851 = vmul.f32 %v847, %v847
  %852 = vadd.xlane.f32.xlu0 %v848
  %v853 = vpop.xlane.xlu0 %852
  %854 = vadd.xlane.f32.xlu0 %v849
  %v855 = vpop.xlane.xlu0 %854
  %856 = vadd.xlane.f32.xlu0 %v850
  %v857 = vpop.xlane.xlu0 %856
  %858 = vadd.xlane.f32.xlu0 %v851
  %v859 = vpop.xlane.xlu0 %858
  %v860 = vmul.f32 %v853, 0.0078125
  %v861 = vmul.f32 %v855, 0.0078125
  %v862 = vmul.f32 %v857, 0.0078125
  %v863 = vmul.f32 %v859, 0.0078125
  %v864 = vadd.f32 %v860, 1e-05
  %v865 = vadd.f32 %v861, 1e-05
  %v866 = vadd.f32 %v862, 1e-05
  %v867 = vadd.f32 %v863, 1e-05
  %v868 = vrsqrt.pop %v864
  %v869 = vrsqrt.pop %v865
  %v870 = vrsqrt.pop %v866
  %v871 = vrsqrt.pop %v867
  %v872 = vmul.f32 %v844, %v868
  %v873 = vmul.f32 %v845, %v869
  %v874 = vmul.f32 %v846, %v870
  %v875 = vmul.f32 %v847, %v871
  %876 = vset.pattern.permute.xlu0 14
  %877 = vperm.xlu0 %876, %v11
  %v878 = vpop.permute.xlu0 %877
  %880 = vset.pattern.permute.xlu0 14
  %881 = vperm.xlu0 %880, %v12
  %v882 = vpop.permute.xlu0 %881
  %884 = vset.pattern.permute.xlu0 14
  %885 = vperm.xlu0 %884, %v13
  %v886 = vpop.permute.xlu0 %885
  %888 = vset.pattern.permute.xlu0 14
  %889 = vperm.xlu0 %888, %v14
  %v890 = vpop.permute.xlu0 %889
  %v892 = vmul.f32 %v872, %v878
  %v893 = vmul.f32 %v873, %v882
  %v894 = vmul.f32 %v874, %v886
  %v895 = vmul.f32 %v875, %v890
  %896 = vset.pattern.permute.xlu0 15
  %897 = vperm.xlu0 %896, %v11
  %v898 = vpop.permute.xlu0 %897
  %900 = vset.pattern.permute.xlu0 15
  %901 = vperm.xlu0 %900, %v12
  %v902 = vpop.permute.xlu0 %901
  %904 = vset.pattern.permute.xlu0 15
  %905 = vperm.xlu0 %904, %v13
  %v906 = vpop.permute.xlu0 %905
  %908 = vset.pattern.permute.xlu0 15
  %909 = vperm.xlu0 %908, %v14
  %v910 = vpop.permute.xlu0 %909
  %v912 = vadd.f32 %v892, %v898
  %v913 = vadd.f32 %v893, %v902
  %v914 = vadd.f32 %v894, %v906
  %v915 = vadd.f32 %v895, %v910
  %v916 = vmul.f32 %v912, 0.5
  %v917 = vmul.f32 %v913, 0.5
  %v918 = vmul.f32 %v914, 0.5
  %v919 = vmul.f32 %v915, 0.5
  %v920 = vmul.f32 %v912, 0.70710677
  %v921 = vmul.f32 %v913, 0.70710677
  %v922 = vmul.f32 %v914, 0.70710677
  %v923 = vmul.f32 %v915, 0.70710677
  %v924 = vand.u32 2147483647, %v920
  %v925 = vand.u32 2147483647, %v921
  %v926 = vand.u32 2147483647, %v922
  %v927 = vand.u32 2147483647, %v923
  %v928 = vmul.f32 %v924, 0.3275911
  %v929 = vmul.f32 %v925, 0.3275911
  %v930 = vmul.f32 %v926, 0.3275911
  %v931 = vmul.f32 %v927, 0.3275911
  %v932 = vadd.f32 %v928, 1.0
  %v933 = vadd.f32 %v929, 1.0
  %v934 = vadd.f32 %v930, 1.0
  %v935 = vadd.f32 %v931, 1.0
  %v936 = vrcp.pop %v932
  %v937 = vmul.f32 1.0, %v936
  %v938 = vrcp.pop %v933
  %v939 = vmul.f32 1.0, %v938
  %v940 = vrcp.pop %v934
  %v941 = vmul.f32 1.0, %v940
  %v942 = vrcp.pop %v935
  %v943 = vmul.f32 1.0, %v942
  %v944 = vmul.f32 %v937, 1.0614054
  %v945 = vmul.f32 %v939, 1.0614054
  %v946 = vmul.f32 %v941, 1.0614054
  %v947 = vmul.f32 %v943, 1.0614054
  %v948 = vadd.f32 %v944, -1.4531521
  %v949 = vadd.f32 %v945, -1.4531521
  %v950 = vadd.f32 %v946, -1.4531521
  %v951 = vadd.f32 %v947, -1.4531521
  %v952 = vmul.f32 %v937, %v948
  %v953 = vmul.f32 %v939, %v949
  %v954 = vmul.f32 %v941, %v950
  %v955 = vmul.f32 %v943, %v951
  %v956 = vadd.f32 %v952, 1.4214138
  %v957 = vadd.f32 %v953, 1.4214138
  %v958 = vadd.f32 %v954, 1.4214138
  %v959 = vadd.f32 %v955, 1.4214138
  %v960 = vmul.f32 %v937, %v956
  %v961 = vmul.f32 %v939, %v957
  %v962 = vmul.f32 %v941, %v958
  %v963 = vmul.f32 %v943, %v959
  %v964 = vadd.f32 %v960, -0.28449672
  %v965 = vadd.f32 %v961, -0.28449672
  %v966 = vadd.f32 %v962, -0.28449672
  %v967 = vadd.f32 %v963, -0.28449672
  %v968 = vmul.f32 %v937, %v964
  %v969 = vmul.f32 %v939, %v965
  %v970 = vmul.f32 %v941, %v966
  %v971 = vmul.f32 %v943, %v967
  %v972 = vadd.f32 %v968, 0.2548296
  %v973 = vadd.f32 %v969, 0.2548296
  %v974 = vadd.f32 %v970, 0.2548296
  %v975 = vadd.f32 %v971, 0.2548296
  %v976 = vmul.f32 %v937, %v972
  %v977 = vmul.f32 %v939, %v973
  %v978 = vmul.f32 %v941, %v974
  %v979 = vmul.f32 %v943, %v975
  %v980 = vsub.f32 0.0, %v924
  %v981 = vsub.f32 0.0, %v925
  %v982 = vsub.f32 0.0, %v926
  %v983 = vsub.f32 0.0, %v927
  %v984 = vmul.f32 %v980, %v924
  %v985 = vmul.f32 %v981, %v925
  %v986 = vmul.f32 %v982, %v926
  %v987 = vmul.f32 %v983, %v927
  %v988 = vmul.f32 %v984, 1.442695
  %v989 = vpow.pop %v988
  %v990 = vmul.f32 %v985, 1.442695
  %v991 = vpow.pop %v990
  %v992 = vmul.f32 %v986, 1.442695
  %v993 = vpow.pop %v992
  %v994 = vmul.f32 %v987, 1.442695
  %v995 = vpow.pop %v994
  %v996 = vmul.f32 %v976, %v989
  %v997 = vmul.f32 %v977, %v991
  %v998 = vmul.f32 %v978, %v993
  %v999 = vmul.f32 %v979, %v995
  %v1000 = vsub.f32 1.0, %v996
  %v1001 = vsub.f32 1.0, %v997
  %v1002 = vsub.f32 1.0, %v998
  %v1003 = vsub.f32 1.0, %v999
  %vm1004 = vcmp.ge.f32.partialorder %v920, 0.0
  %vm1005 = vcmp.ge.f32.partialorder %v921, 0.0
  %vm1006 = vcmp.ge.f32.partialorder %v922, 0.0
  %vm1007 = vcmp.ge.f32.partialorder %v923, 0.0
  %v1008 = vsub.f32 0.0, %v1000
  %v1009 = vsub.f32 0.0, %v1001
  %v1010 = vsub.f32 0.0, %v1002
  %v1011 = vsub.f32 0.0, %v1003
  %v1012 = vsel %vm1004, %v1000, %v1008
  %v1013 = vsel %vm1005, %v1001, %v1009
  %v1014 = vsel %vm1006, %v1002, %v1010
  %v1015 = vsel %vm1007, %v1003, %v1011
  %v1016 = vadd.f32 %v1012, 1.0
  %v1017 = vadd.f32 %v1013, 1.0
  %v1018 = vadd.f32 %v1014, 1.0
  %v1019 = vadd.f32 %v1015, 1.0
  %v1020 = vmul.f32 %v916, %v1016
  %v1021 = vmul.f32 %v917, %v1017
  %v1022 = vmul.f32 %v918, %v1018
  %v1023 = vmul.f32 %v919, %v1019
  %v1024 = vld [vmem:[%s1 + $0xc8] sm:$0xff]
  %v1025 = vld [vmem:[%s1 + $0xd0] sm:$0xff]
  %v1026 = vld [vmem:[%s1 + $0xd8] sm:$0xff]
  %v1027 = vld [vmem:[%s1 + $0xe0] sm:$0xff]
  %v1028 = vadd.f32 %v1020, %v1021
  %v1029 = vadd.f32 %v1028, %v1022
  %v1030 = vadd.f32 %v1029, %v1023
  %v1031 = vrot.slane %v1030, 4
  %v1032 = vadd.f32 %v1030, %v1031
  %v1033 = vrot.slane %v1032, 2
  %v1034 = vadd.f32 %v1032, %v1033
  %v1035 = vrot.slane %v1034, 1
  %v1036 = vadd.f32 %v1034, %v1035
  %v1037 = vrcp.pop 32.0
  %v1038 = vmul.f32 %v1036, %v1037
  %v1039 = vsub.f32 %v1020, %v1038
  %v1040 = vsub.f32 %v1021, %v1038
  %v1041 = vsub.f32 %v1022, %v1038
  %v1042 = vsub.f32 %v1023, %v1038
  %v1043 = vmul.f32 %v1039, %v1039
  %v1044 = vmul.f32 %v1040, %v1040
  %v1045 = vmul.f32 %v1041, %v1041
  %v1046 = vmul.f32 %v1042, %v1042
  %v1047 = vadd.f32 %v1043, %v1044
  %v1048 = vadd.f32 %v1047, %v1045
  %v1049 = vadd.f32 %v1048, %v1046
  %v1050 = vrot.slane %v1049, 4
  %v1051 = vadd.f32 %v1049, %v1050
  %v1052 = vrot.slane %v1051, 2
  %v1053 = vadd.f32 %v1051, %v1052
  %v1054 = vrot.slane %v1053, 1
  %v1055 = vadd.f32 %v1053, %v1054
  %v1056 = vmul.f32 %v1055, %v1037
  %v1057 = vadd.f32 %v1056, 1e-05
  %v1058 = vrsqrt.pop %v1057
  %v1059 = vmul.f32 %v1039, %v1058
  %v1060 = vmul.f32 %v1040, %v1058
  %v1061 = vmul.f32 %v1041, %v1058
  %v1062 = vmul.f32 %v1042, %v1058
  %1064 = vset.pattern.permute.xlu0 0
  %1065 = vperm.xlu0 %1064, %v1024
  %v1066 = vpop.permute.xlu0 %1065
  %1069 = vset.pattern.permute.xlu0 0
  %1070 = vperm.xlu0 %1069, %v1025
  %v1071 = vpop.permute.xlu0 %1070
  %1074 = vset.pattern.permute.xlu0 0
  %1075 = vperm.xlu0 %1074, %v1026
  %v1076 = vpop.permute.xlu0 %1075
  %1079 = vset.pattern.permute.xlu0 0
  %1080 = vperm.xlu0 %1079, %v1027
  %v1081 = vpop.permute.xlu0 %1080
  %v1083 = vmul.f32 %v1059, %v1066
  %v1084 = vmul.f32 %v1060, %v1071
  %v1085 = vmul.f32 %v1061, %v1076
  %v1086 = vmul.f32 %v1062, %v1081
  %1087 = vset.pattern.permute.xlu0 1
  %1088 = vperm.xlu0 %1087, %v1024
  %v1089 = vpop.permute.xlu0 %1088
  %1091 = vset.pattern.permute.xlu0 1
  %1092 = vperm.xlu0 %1091, %v1025
  %v1093 = vpop.permute.xlu0 %1092
  %1095 = vset.pattern.permute.xlu0 1
  %1096 = vperm.xlu0 %1095, %v1026
  %v1097 = vpop.permute.xlu0 %1096
  %1099 = vset.pattern.permute.xlu0 1
  %1100 = vperm.xlu0 %1099, %v1027
  %v1101 = vpop.permute.xlu0 %1100
  %v1103 = vadd.f32 %v1083, %v1089
  %v1104 = vadd.f32 %v1084, %v1093
  %v1105 = vadd.f32 %v1085, %v1097
  %v1106 = vadd.f32 %v1086, %v1101
  %v1107 = vld [vmem:[%s1 + $0x20] sm:$0xff]
  %v1108 = vld [vmem:[%s1 + $0x28] sm:$0xff]
  %v1109 = vld [vmem:[%s1 + $0x30] sm:$0xff]
  %v1110 = vld [vmem:[%s1 + $0x38] sm:$0xff]
  %v1111 = vld [vmem:[%s1 + $0x40] sm:$0xff]
  %v1112 = vld [vmem:[%s1 + $0x48] sm:$0xff]
  %v1113 = vld [vmem:[%s1 + $0x50] sm:$0xff]
  %v1114 = vld [vmem:[%s1 + $0x58] sm:$0xff]
  %v1115 = vld [vmem:[%s1 + $0x60] sm:$0xff]
  %1117 = vset.pattern.permute.xlu0 32
  %1118 = vperm.xlu0 %1117, %v1107
  %v1119 = vpop.permute.xlu0 %1118
  %1122 = vset.pattern.permute.xlu0 32
  %1123 = vperm.xlu0 %1122, %v1108
  %v1124 = vpop.permute.xlu0 %1123
  %1127 = vset.pattern.permute.xlu0 32
  %1128 = vperm.xlu0 %1127, %v1109
  %v1129 = vpop.permute.xlu0 %1128
  %1132 = vset.pattern.permute.xlu0 32
  %1133 = vperm.xlu0 %1132, %v1110
  %v1134 = vpop.permute.xlu0 %1133
  %1137 = vset.pattern.permute.xlu0 32
  %1138 = vperm.xlu0 %1137, %v1111
  %v1139 = vpop.permute.xlu0 %1138
  %1142 = vset.pattern.permute.xlu0 32
  %1143 = vperm.xlu0 %1142, %v1112
  %v1144 = vpop.permute.xlu0 %1143
  %1147 = vset.pattern.permute.xlu0 32
  %1148 = vperm.xlu0 %1147, %v1113
  %v1149 = vpop.permute.xlu0 %1148
  %1152 = vset.pattern.permute.xlu0 32
  %1153 = vperm.xlu0 %1152, %v1114
  %v1154 = vpop.permute.xlu0 %1153
  %1157 = vset.pattern.permute.xlu0 32
  %1158 = vperm.xlu0 %1157, %v1115
  %v1159 = vpop.permute.xlu0 %1158
  %vm1161 = vcmask 261120
  %v1162 = vsel %vm1161, %v1107, 0
  %v1164 = vsel %vm1161, %v1108, 0
  %v1166 = vsel %vm1161, %v1109, 0
  %v1168 = vsel %vm1161, %v1110, 0
  %v1170 = vsel %vm1161, %v1111, 0
  %v1172 = vsel %vm1161, %v1112, 0
  %v1174 = vsel %vm1161, %v1113, 0
  %v1176 = vsel %vm1161, %v1114, 0
  %v1178 = vsel %vm1161, %v1115, 0
  %1180 = vmatprep.subr.mxu0 0.0
  %1181 = vmatpush1.msra.mxu0 %v1103
  %1182 = vmatprep.subr.mxu0 0.0
  %1183 = vmatpush1.msra.mxu0 %v1104
  %1184 = vmatprep.subr.mxu0 0.0
  %1185 = vmatpush1.msra.mxu0 %v1105
  %1186 = vmatprep.subr.mxu0 0.0
  %1187 = vmatpush1.msra.mxu0 %v1106
  %1188 = vmatprep.subr.mxu0 0.0
  %1189 = vmatpush1.msra.mxu0 0.0
  %1190 = vmatprep.subr.mxu0 0.0
  %1191 = vmatpush1.msra.mxu0 0.0
  %1192 = vmatprep.subr.mxu0 0.0
  %1193 = vmatpush1.msra.mxu0 0.0
  %1194 = vmatprep.subr.mxu0 0.0
  %1195 = vmatpush1.msra.mxu0 0.0
  %1196 = vmatprep.subr.mxu0 0.0
  %1197 = vmatpush1.msra.mxu0 0.0
  %1198 = vmatprep.subr.mxu0 0.0
  %1199 = vmatpush1.msra.mxu0 0.0
  %1200 = vmatprep.subr.mxu0 0.0
  %1201 = vmatpush1.msra.mxu0 0.0
  %1202 = vmatprep.subr.mxu0 0.0
  %1203 = vmatpush1.msra.mxu0 0.0
  %1204 = vmatprep.subr.mxu0 0.0
  %1205 = vmatpush1.msra.mxu0 0.0
  %1206 = vmatprep.subr.mxu0 0.0
  %1207 = vmatpush1.msra.mxu0 0.0
  %1208 = vmatprep.subr.mxu0 0.0
  %1209 = vmatpush1.msra.mxu0 0.0
  %1210 = vmatprep.subr.mxu0 0.0
  %1211 = vmatpush1.msra.mxu0 0.0
  %1212 = vmatprep.subr.mxu0 0.0
  %1213 = vmatpush1.msra.mxu0 0.0
  %1214 = vmatprep.subr.mxu0 0.0
  %1215 = vmatpush1.msra.mxu0 0.0
  %1216 = vmatprep.subr.mxu0 0.0
  %1217 = vmatpush1.msra.mxu0 0.0
  %1218 = vmatprep.subr.mxu0 0.0
  %1219 = vmatpush1.msra.mxu0 0.0
  %1220 = vmatprep.subr.mxu0 0.0
  %1221 = vmatpush1.msra.mxu0 0.0
  %1222 = vmatprep.subr.mxu0 0.0
  %1223 = vmatpush1.msra.mxu0 0.0
  %1224 = vmatprep.subr.mxu0 0.0
  %1225 = vmatpush1.msra.mxu0 0.0
  %1226 = vmatprep.subr.mxu0 0.0
  %1227 = vmatpush1.msra.mxu0 0.0
  %1228 = vmatprep.subr.mxu0 0.0
  %1229 = vmatpush1.msra.mxu0 0.0
  %1230 = vmatprep.subr.mxu0 0.0
  %1231 = vmatpush1.msra.mxu0 0.0
  %1232 = vmatprep.subr.mxu0 0.0
  %1233 = vmatpush1.msra.mxu0 0.0
  %1234 = vmatprep.subr.mxu0 0.0
  %1235 = vmatpush1.msra.mxu0 0.0
  %1236 = vmatprep.subr.mxu0 0.0
  %1237 = vmatpush1.msra.mxu0 0.0
  %1238 = vmatprep.subr.mxu0 0.0
  %1239 = vmatpush1.msra.mxu0 0.0
  %1240 = vmatprep.subr.mxu0 0.0
  %1241 = vmatpush1.msra.mxu0 0.0
  %1242 = vmatprep.subr.mxu0 0.0
  %1243 = vmatpush1.msra.mxu0 0.0
  %1244 = vmatprep.mubr.f32.mxu0 0.0
  %1245 = vmatmul.mubr.f32.gmra.mrb[0].mxu0 %v1162
  %v1246 = vpop.f32.mrb[0].mxu0
  %v1247 = vadd.f32 %v1119, %v1246
  %v1248 = vpop.f32.mrb[0].mxu0
  %1249 = vmatprep.mubr.f32.mxu0 0.0
  %1250 = vmatmul.mubr.f32.gmra.mrb[0].mxu0 %v1164
  %v1251 = vpop.f32.mrb[0].mxu0
  %v1252 = vadd.f32 %v1124, %v1251
  %v1253 = vpop.f32.mrb[0].mxu0
  %1254 = vmatprep.mubr.f32.mxu0 0.0
  %1255 = vmatmul.mubr.f32.gmra.mrb[0].mxu0 %v1166
  %v1256 = vpop.f32.mrb[0].mxu0
  %v1257 = vadd.f32 %v1129, %v1256
  %v1258 = vpop.f32.mrb[0].mxu0
  %1259 = vmatprep.mubr.f32.mxu0 0.0
  %1260 = vmatmul.mubr.f32.gmra.mrb[0].mxu0 %v1168
  %v1261 = vpop.f32.mrb[0].mxu0
  %v1262 = vadd.f32 %v1134, %v1261
  %v1263 = vpop.f32.mrb[0].mxu0
  %1264 = vmatprep.mubr.f32.mxu0 0.0
  %1265 = vmatmul.mubr.f32.gmra.mrb[0].mxu0 %v1170
  %v1266 = vpop.f32.mrb[0].mxu0
  %v1267 = vadd.f32 %v1139, %v1266
  %v1268 = vpop.f32.mrb[0].mxu0
  %1269 = vmatprep.mubr.f32.mxu0 0.0
  %1270 = vmatmul.mubr.f32.gmra.mrb[0].mxu0 %v1172
  %v1271 = vpop.f32.mrb[0].mxu0
  %v1272 = vadd.f32 %v1144, %v1271
  %v1273 = vpop.f32.mrb[0].mxu0
  %1274 = vmatprep.mubr.f32.mxu0 0.0
  %1275 = vmatmul.mubr.f32.gmra.mrb[0].mxu0 %v1174
  %v1276 = vpop.f32.mrb[0].mxu0
  %v1277 = vadd.f32 %v1149, %v1276
  %v1278 = vpop.f32.mrb[0].mxu0
  %1279 = vmatprep.mubr.f32.mxu0 0.0
  %1280 = vmatmul.mubr.f32.gmra.mrb[0].mxu0 %v1176
  %v1281 = vpop.f32.mrb[0].mxu0
  %v1282 = vadd.f32 %v1154, %v1281
  %v1283 = vpop.f32.mrb[0].mxu0
  %1284 = vmatprep.mubr.f32.mxu0 0.0
  %1285 = vmatmul.mubr.f32.gmra.mrb[0].mxu0 %v1178
  %v1286 = vpop.f32.mrb[0].mxu0
  %v1287 = vadd.f32 %v1159, %v1286
  %v1288 = vpop.f32.mrb[0].mxu0
  %1289 = vdwg.mxu0
  %v1290 = vld [vmem:[%s1 + $0xf8] sm:$0xff]
  %v1291 = vld [vmem:[%s1 + $0x100] sm:$0xff]
  %v1292 = vld [vmem:[%s1 + $0x108] sm:$0xff]
  %v1293 = vld [vmem:[%s1 + $0x110] sm:$0xff]
  %v1294 = vld [vmem:[%s1 + $0x118] sm:$0xff]
  %v1295 = vld [vmem:[%s1 + $0x120] sm:$0xff]
  %v1296 = vld [vmem:[%s1 + $0x128] sm:$0xff]
  %v1297 = vld [vmem:[%s1 + $0x130] sm:$0xff]
  %v1298 = vld [vmem:[%s1 + $0x138] sm:$0xff]
  %v1299 = vld [vmem:[%s1 + $0x140] sm:$0xff]
  %v1300 = vld [vmem:[%s1 + $0x148] sm:$0xff]
  %v1301 = vld [vmem:[%s1 + $0x150] sm:$0xff]
  %v1302 = vld [vmem:[%s1 + $0x158] sm:$0xff]
  %v1303 = vld [vmem:[%s1 + $0x160] sm:$0xff]
  %v1304 = vld [vmem:[%s1 + $0x168] sm:$0xff]
  %v1305 = vld [vmem:[%s1 + $0x170] sm:$0xff]
  %v1306 = vld [vmem:[%s1 + $0x178] sm:$0xff]
  %v1307 = vld [vmem:[%s1 + $0x180] sm:$0xff]
  %vm1308 = vcmask 1040384
  %v1309 = vsel %vm1308, %v1287, -inf
  %1310 = vmax.xlane.f32.xlu0 %v1309
  %v1311 = vpop.xlane.xlu0 %1310
  %v1312 = vsub.f32 %v1287, %v1311
  %v1313 = vmul.f32 %v1312, 1.442695
  %v1314 = vpow.pop %v1313
  %1315 = vmatprep.subr.mxu0 0.0
  %1316 = vmatpush1.msra.mxu0 %v1290
  %1317 = vmatprep.subr.mxu0 0.0
  %1318 = vmatpush1.msra.mxu0 %v1291
  %1319 = vmatprep.subr.mxu0 0.0
  %1320 = vmatpush1.msra.mxu0 %v1292
  %1321 = vmatprep.subr.mxu0 0.0
  %1322 = vmatpush1.msra.mxu0 %v1293
  %1323 = vmatprep.subr.mxu0 0.0
  %1324 = vmatpush1.msra.mxu0 %v1294
  %1325 = vmatprep.subr.mxu0 0.0
  %1326 = vmatpush1.msra.mxu0 %v1295
  %1327 = vmatprep.subr.mxu0 0.0
  %1328 = vmatpush1.msra.mxu0 %v1296
  %1329 = vmatprep.subr.mxu0 0.0
  %1330 = vmatpush1.msra.mxu0 %v1297
  %1331 = vmatprep.subr.mxu0 0.0
  %1332 = vmatpush1.msra.mxu0 %v1298
  %1333 = vmatprep.subr.mxu0 0.0
  %1334 = vmatpush1.msra.mxu0 %v1299
  %1335 = vmatprep.subr.mxu0 0.0
  %1336 = vmatpush1.msra.mxu0 %v1300
  %1337 = vmatprep.subr.mxu0 0.0
  %1338 = vmatpush1.msra.mxu0 %v1301
  %1339 = vmatprep.subr.mxu0 0.0
  %1340 = vmatpush1.msra.mxu0 %v1302
  %1341 = vmatprep.subr.mxu0 0.0
  %1342 = vmatpush1.msra.mxu0 %v1303
  %1343 = vmatprep.subr.mxu0 0.0
  %1344 = vmatpush1.msra.mxu0 %v1304
  %1345 = vmatprep.subr.mxu0 0.0
  %1346 = vmatpush1.msra.mxu0 %v1305
  %1347 = vmatprep.subr.mxu0 0.0
  %1348 = vmatpush1.msra.mxu0 0.0
  %1349 = vmatprep.subr.mxu0 0.0
  %1350 = vmatpush1.msra.mxu0 0.0
  %1351 = vmatprep.subr.mxu0 0.0
  %1352 = vmatpush1.msra.mxu0 0.0
  %1353 = vmatprep.subr.mxu0 0.0
  %1354 = vmatpush1.msra.mxu0 0.0
  %1355 = vmatprep.subr.mxu0 0.0
  %1356 = vmatpush1.msra.mxu0 0.0
  %1357 = vmatprep.subr.mxu0 0.0
  %1358 = vmatpush1.msra.mxu0 0.0
  %1359 = vmatprep.subr.mxu0 0.0
  %1360 = vmatpush1.msra.mxu0 0.0
  %1361 = vmatprep.subr.mxu0 0.0
  %1362 = vmatpush1.msra.mxu0 0.0
  %1363 = vmatprep.subr.mxu0 0.0
  %1364 = vmatpush1.msra.mxu0 0.0
  %1365 = vmatprep.subr.mxu0 0.0
  %1366 = vmatpush1.msra.mxu0 0.0
  %1367 = vmatprep.subr.mxu0 0.0
  %1368 = vmatpush1.msra.mxu0 0.0
  %1369 = vmatprep.subr.mxu0 0.0
  %1370 = vmatpush1.msra.mxu0 0.0
  %1371 = vmatprep.subr.mxu0 0.0
  %1372 = vmatpush1.msra.mxu0 0.0
  %1373 = vmatprep.subr.mxu0 0.0
  %1374 = vmatpush1.msra.mxu0 0.0
  %1375 = vmatprep.subr.mxu0 0.0
  %1376 = vmatpush1.msra.mxu0 0.0
  %1377 = vmatprep.subr.mxu0 0.0
  %1378 = vmatpush1.msra.mxu0 0.0
  %1379 = vmatprep.mubr.f32.mxu0 0.0
  %1380 = vmatmul.mubr.f32.gmra.mrb[0].mxu0 %v1314
  %v1381 = vpop.f32.mrb[0].mxu0
  %v1382 = vadd.f32 0.0, %v1381
  %v1383 = vpop.f32.mrb[0].mxu0
  %1384 = vdwg.mxu0
  %v1385 = vlaneseq
  %v1386 = vshrl.u32 %v1385, 7
  %v1387 = vsub.s32 0, %v1386
  %v1388 = vrot.slane %v1314, %v1387
  %v1389 = vmul.f32 %v1247, %v1388
  %v1390 = vmul.f32 %v1252, %v1388
  %v1391 = vmul.f32 %v1257, %v1388
  %v1392 = vmul.f32 %v1262, %v1388
  %1393 = vmatprep.subr.mxu0 0.0
  %1394 = vmatpush1.msra.mxu0 %v1290
  %1395 = vmatprep.subr.mxu0 0.0
  %1396 = vmatpush1.msra.mxu0 %v1291
  %1397 = vmatprep.subr.mxu0 0.0
  %1398 = vmatpush1.msra.mxu0 %v1292
  %1399 = vmatprep.subr.mxu0 0.0
  %1400 = vmatpush1.msra.mxu0 %v1293
  %1401 = vmatprep.subr.mxu0 0.0
  %1402 = vmatpush1.msra.mxu0 %v1294
  %1403 = vmatprep.subr.mxu0 0.0
  %1404 = vmatpush1.msra.mxu0 %v1295
  %1405 = vmatprep.subr.mxu0 0.0
  %1406 = vmatpush1.msra.mxu0 %v1296
  %1407 = vmatprep.subr.mxu0 0.0
  %1408 = vmatpush1.msra.mxu0 %v1297
  %1409 = vmatprep.subr.mxu0 0.0
  %1410 = vmatpush1.msra.mxu0 %v1298
  %1411 = vmatprep.subr.mxu0 0.0
  %1412 = vmatpush1.msra.mxu0 %v1299
  %1413 = vmatprep.subr.mxu0 0.0
  %1414 = vmatpush1.msra.mxu0 %v1300
  %1415 = vmatprep.subr.mxu0 0.0
  %1416 = vmatpush1.msra.mxu0 %v1301
  %1417 = vmatprep.subr.mxu0 0.0
  %1418 = vmatpush1.msra.mxu0 %v1302
  %1419 = vmatprep.subr.mxu0 0.0
  %1420 = vmatpush1.msra.mxu0 %v1303
  %1421 = vmatprep.subr.mxu0 0.0
  %1422 = vmatpush1.msra.mxu0 %v1304
  %1423 = vmatprep.subr.mxu0 0.0
  %1424 = vmatpush1.msra.mxu0 %v1305
  %1425 = vmatprep.subr.mxu0 0.0
  %1426 = vmatpush1.msra.mxu0 0.0
  %1427 = vmatprep.subr.mxu0 0.0
  %1428 = vmatpush1.msra.mxu0 0.0
  %1429 = vmatprep.subr.mxu0 0.0
  %1430 = vmatpush1.msra.mxu0 0.0
  %1431 = vmatprep.subr.mxu0 0.0
  %1432 = vmatpush1.msra.mxu0 0.0
  %1433 = vmatprep.subr.mxu0 0.0
  %1434 = vmatpush1.msra.mxu0 0.0
  %1435 = vmatprep.subr.mxu0 0.0
  %1436 = vmatpush1.msra.mxu0 0.0
  %1437 = vmatprep.subr.mxu0 0.0
  %1438 = vmatpush1.msra.mxu0 0.0
  %1439 = vmatprep.subr.mxu0 0.0
  %1440 = vmatpush1.msra.mxu0 0.0
  %1441 = vmatprep.subr.mxu0 0.0
  %1442 = vmatpush1.msra.mxu0 0.0
  %1443 = vmatprep.subr.mxu0 0.0
  %1444 = vmatpush1.msra.mxu0 0.0
  %1445 = vmatprep.subr.mxu0 0.0
  %1446 = vmatpush1.msra.mxu0 0.0
  %1447 = vmatprep.subr.mxu0 0.0
  %1448 = vmatpush1.msra.mxu0 0.0
  %1449 = vmatprep.subr.mxu0 0.0
  %1450 = vmatpush1.msra.mxu0 0.0
  %1451 = vmatprep.subr.mxu0 0.0
  %1452 = vmatpush1.msra.mxu0 0.0
  %1453 = vmatprep.subr.mxu0 0.0
  %1454 = vmatpush1.msra.mxu0 0.0
  %1455 = vmatprep.subr.mxu0 0.0
  %1456 = vmatpush1.msra.mxu0 0.0
  %1457 = vmatprep.mubr.f32.mxu0 0.0
  %1458 = vmatmul.mubr.f32.gmra.mrb[0].mxu0 %v1389
  %v1459 = vpop.f32.mrb[0].mxu0
  %v1460 = vadd.f32 0.0, %v1459
  %v1461 = vpop.f32.mrb[0].mxu0
  %1462 = vmatprep.mubr.f32.mxu0 0.0
  %1463 = vmatmul.mubr.f32.gmra.mrb[0].mxu0 %v1390
  %v1464 = vpop.f32.mrb[0].mxu0
  %v1465 = vadd.f32 0.0, %v1464
  %v1466 = vpop.f32.mrb[0].mxu0
  %1467 = vmatprep.mubr.f32.mxu0 0.0
  %1468 = vmatmul.mubr.f32.gmra.mrb[0].mxu0 %v1391
  %v1469 = vpop.f32.mrb[0].mxu0
  %v1470 = vadd.f32 0.0, %v1469
  %v1471 = vpop.f32.mrb[0].mxu0
  %1472 = vmatprep.mubr.f32.mxu0 0.0
  %1473 = vmatmul.mubr.f32.gmra.mrb[0].mxu0 %v1392
  %v1474 = vpop.f32.mrb[0].mxu0
  %v1475 = vadd.f32 0.0, %v1474
  %v1476 = vpop.f32.mrb[0].mxu0
  %1477 = vdwg.mxu0
  %v1478 = vrcp.pop %v1382
  %v1479 = vlaneseq
  %v1480 = vshrl.u32 %v1479, 7
  %v1481 = vsub.s32 0, %v1480
  %v1482 = vrot.slane %v1478, %v1481
  %v1483 = vmul.f32 %v1460, %v1482
  %v1484 = vmul.f32 %v1465, %v1482
  %v1485 = vmul.f32 %v1470, %v1482
  %v1486 = vmul.f32 %v1475, %v1482
  %vm1487 = vcmask 130048
  %v1489 = vsel %vm1487, %v1483, 0
  %v1492 = vsel %vm1487, %v1484, 0
  %v1495 = vsel %vm1487, %v1485, 0
  %v1498 = vsel %vm1487, %v1486, 0
  %1500 = vmatprep.subr.mxu0 0.0
  %1501 = vmatpush1.msra.mxu0 %v1306
  %1502 = vmatprep.subr.mxu0 0.0
  %1503 = vmatpush1.msra.mxu0 %v1307
  %1504 = vmatprep.subr.mxu0 0.0
  %1505 = vmatpush1.msra.mxu0 0.0
  %1506 = vmatprep.subr.mxu0 0.0
  %1507 = vmatpush1.msra.mxu0 0.0
  %1508 = vmatprep.subr.mxu0 0.0
  %1509 = vmatpush1.msra.mxu0 0.0
  %1510 = vmatprep.subr.mxu0 0.0
  %1511 = vmatpush1.msra.mxu0 0.0
  %1512 = vmatprep.subr.mxu0 0.0
  %1513 = vmatpush1.msra.mxu0 0.0
  %1514 = vmatprep.subr.mxu0 0.0
  %1515 = vmatpush1.msra.mxu0 0.0
  %1516 = vmatprep.subr.mxu0 0.0
  %1517 = vmatpush1.msra.mxu0 0.0
  %1518 = vmatprep.subr.mxu0 0.0
  %1519 = vmatpush1.msra.mxu0 0.0
  %1520 = vmatprep.subr.mxu0 0.0
  %1521 = vmatpush1.msra.mxu0 0.0
  %1522 = vmatprep.subr.mxu0 0.0
  %1523 = vmatpush1.msra.mxu0 0.0
  %1524 = vmatprep.subr.mxu0 0.0
  %1525 = vmatpush1.msra.mxu0 0.0
  %1526 = vmatprep.subr.mxu0 0.0
  %1527 = vmatpush1.msra.mxu0 0.0
  %1528 = vmatprep.subr.mxu0 0.0
  %1529 = vmatpush1.msra.mxu0 0.0
  %1530 = vmatprep.subr.mxu0 0.0
  %1531 = vmatpush1.msra.mxu0 0.0
  %1532 = vmatprep.subr.mxu0 0.0
  %1533 = vmatpush1.msra.mxu0 0.0
  %1534 = vmatprep.subr.mxu0 0.0
  %1535 = vmatpush1.msra.mxu0 0.0
  %1536 = vmatprep.subr.mxu0 0.0
  %1537 = vmatpush1.msra.mxu0 0.0
  %1538 = vmatprep.subr.mxu0 0.0
  %1539 = vmatpush1.msra.mxu0 0.0
  %1540 = vmatprep.subr.mxu0 0.0
  %1541 = vmatpush1.msra.mxu0 0.0
  %1542 = vmatprep.subr.mxu0 0.0
  %1543 = vmatpush1.msra.mxu0 0.0
  %1544 = vmatprep.subr.mxu0 0.0
  %1545 = vmatpush1.msra.mxu0 0.0
  %1546 = vmatprep.subr.mxu0 0.0
  %1547 = vmatpush1.msra.mxu0 0.0
  %1548 = vmatprep.subr.mxu0 0.0
  %1549 = vmatpush1.msra.mxu0 0.0
  %1550 = vmatprep.subr.mxu0 0.0
  %1551 = vmatpush1.msra.mxu0 0.0
  %1552 = vmatprep.subr.mxu0 0.0
  %1553 = vmatpush1.msra.mxu0 0.0
  %1554 = vmatprep.subr.mxu0 0.0
  %1555 = vmatpush1.msra.mxu0 0.0
  %1556 = vmatprep.subr.mxu0 0.0
  %1557 = vmatpush1.msra.mxu0 0.0
  %1558 = vmatprep.subr.mxu0 0.0
  %1559 = vmatpush1.msra.mxu0 0.0
  %1560 = vmatprep.subr.mxu0 0.0
  %1561 = vmatpush1.msra.mxu0 0.0
  %1562 = vmatprep.subr.mxu0 0.0
  %1563 = vmatpush1.msra.mxu0 0.0
  %1564 = vmatprep.mubr.f32.mxu0 0.0
  %1565 = vmatmul.mubr.f32.gmra.mrb[0].mxu0 %v1489
  %v1566 = vpop.f32.mrb[0].mxu0
  %v1567 = vadd.f32 0.0, %v1566
  %v1568 = vpop.f32.mrb[0].mxu0
  %1569 = vmatprep.mubr.f32.mxu0 0.0
  %1570 = vmatmul.mubr.f32.gmra.mrb[0].mxu0 %v1492
  %v1571 = vpop.f32.mrb[0].mxu0
  %v1572 = vadd.f32 0.0, %v1571
  %v1573 = vpop.f32.mrb[0].mxu0
  %1574 = vmatprep.mubr.f32.mxu0 0.0
  %1575 = vmatmul.mubr.f32.gmra.mrb[0].mxu0 %v1495
  %v1576 = vpop.f32.mrb[0].mxu0
  %v1577 = vadd.f32 0.0, %v1576
  %v1578 = vpop.f32.mrb[0].mxu0
  %1579 = vmatprep.mubr.f32.mxu0 0.0
  %1580 = vmatmul.mubr.f32.gmra.mrb[0].mxu0 %v1498
  %v1581 = vpop.f32.mrb[0].mxu0
  %v1582 = vadd.f32 0.0, %v1581
  %v1583 = vpop.f32.mrb[0].mxu0
  %1584 = vdwg.mxu0
  %v1585 = vmax.f32 %v1267, 0.0
  %v1586 = vmax.f32 %v1272, 0.0
  %v1587 = vmax.f32 %v1277, 0.0
  %v1588 = vmax.f32 %v1282, 0.0
  %v1589 = vmul.f32 %v1585, %v1567
  %v1590 = vmul.f32 %v1586, %v1572
  %v1591 = vmul.f32 %v1587, %v1577
  %v1592 = vmul.f32 %v1588, %v1582
  %v1593 = vld [vmem:[%s1 + $0x68] sm:$0xff]
  %v1594 = vld [vmem:[%s1 + $0x70] sm:$0xff]
  %v1595 = vld [vmem:[%s1 + $0x78] sm:$0xff]
  %v1596 = vld [vmem:[%s1 + $0x80] sm:$0xff]
  %1598 = vset.pattern.permute.xlu0 32
  %1599 = vperm.xlu0 %1598, %v1593
  %v1600 = vpop.permute.xlu0 %1599
  %1603 = vset.pattern.permute.xlu0 32
  %1604 = vperm.xlu0 %1603, %v1594
  %v1605 = vpop.permute.xlu0 %1604
  %1608 = vset.pattern.permute.xlu0 32
  %1609 = vperm.xlu0 %1608, %v1595
  %v1610 = vpop.permute.xlu0 %1609
  %1613 = vset.pattern.permute.xlu0 32
  %1614 = vperm.xlu0 %1613, %v1596
  %v1615 = vpop.permute.xlu0 %1614
  %v1617 = vsel %vm1161, %v1593, 0
  %v1619 = vsel %vm1161, %v1594, 0
  %v1621 = vsel %vm1161, %v1595, 0
  %v1623 = vsel %vm1161, %v1596, 0
  %1625 = vmatprep.subr.mxu0 0.0
  %1626 = vmatpush1.msra.mxu0 %v1589
  %1627 = vmatprep.subr.mxu0 0.0
  %1628 = vmatpush1.msra.mxu0 %v1590
  %1629 = vmatprep.subr.mxu0 0.0
  %1630 = vmatpush1.msra.mxu0 %v1591
  %1631 = vmatprep.subr.mxu0 0.0
  %1632 = vmatpush1.msra.mxu0 %v1592
  %1633 = vmatprep.subr.mxu0 0.0
  %1634 = vmatpush1.msra.mxu0 0.0
  %1635 = vmatprep.subr.mxu0 0.0
  %1636 = vmatpush1.msra.mxu0 0.0
  %1637 = vmatprep.subr.mxu0 0.0
  %1638 = vmatpush1.msra.mxu0 0.0
  %1639 = vmatprep.subr.mxu0 0.0
  %1640 = vmatpush1.msra.mxu0 0.0
  %1641 = vmatprep.subr.mxu0 0.0
  %1642 = vmatpush1.msra.mxu0 0.0
  %1643 = vmatprep.subr.mxu0 0.0
  %1644 = vmatpush1.msra.mxu0 0.0
  %1645 = vmatprep.subr.mxu0 0.0
  %1646 = vmatpush1.msra.mxu0 0.0
  %1647 = vmatprep.subr.mxu0 0.0
  %1648 = vmatpush1.msra.mxu0 0.0
  %1649 = vmatprep.subr.mxu0 0.0
  %1650 = vmatpush1.msra.mxu0 0.0
  %1651 = vmatprep.subr.mxu0 0.0
  %1652 = vmatpush1.msra.mxu0 0.0
  %1653 = vmatprep.subr.mxu0 0.0
  %1654 = vmatpush1.msra.mxu0 0.0
  %1655 = vmatprep.subr.mxu0 0.0
  %1656 = vmatpush1.msra.mxu0 0.0
  %1657 = vmatprep.subr.mxu0 0.0
  %1658 = vmatpush1.msra.mxu0 0.0
  %1659 = vmatprep.subr.mxu0 0.0
  %1660 = vmatpush1.msra.mxu0 0.0
  %1661 = vmatprep.subr.mxu0 0.0
  %1662 = vmatpush1.msra.mxu0 0.0
  %1663 = vmatprep.subr.mxu0 0.0
  %1664 = vmatpush1.msra.mxu0 0.0
  %1665 = vmatprep.subr.mxu0 0.0
  %1666 = vmatpush1.msra.mxu0 0.0
  %1667 = vmatprep.subr.mxu0 0.0
  %1668 = vmatpush1.msra.mxu0 0.0
  %1669 = vmatprep.subr.mxu0 0.0
  %1670 = vmatpush1.msra.mxu0 0.0
  %1671 = vmatprep.subr.mxu0 0.0
  %1672 = vmatpush1.msra.mxu0 0.0
  %1673 = vmatprep.subr.mxu0 0.0
  %1674 = vmatpush1.msra.mxu0 0.0
  %1675 = vmatprep.subr.mxu0 0.0
  %1676 = vmatpush1.msra.mxu0 0.0
  %1677 = vmatprep.subr.mxu0 0.0
  %1678 = vmatpush1.msra.mxu0 0.0
  %1679 = vmatprep.subr.mxu0 0.0
  %1680 = vmatpush1.msra.mxu0 0.0
  %1681 = vmatprep.subr.mxu0 0.0
  %1682 = vmatpush1.msra.mxu0 0.0
  %1683 = vmatprep.subr.mxu0 0.0
  %1684 = vmatpush1.msra.mxu0 0.0
  %1685 = vmatprep.subr.mxu0 0.0
  %1686 = vmatpush1.msra.mxu0 0.0
  %1687 = vmatprep.subr.mxu0 0.0
  %1688 = vmatpush1.msra.mxu0 0.0
  %1689 = vmatprep.mubr.f32.mxu0 0.0
  %1690 = vmatmul.mubr.f32.gmra.mrb[0].mxu0 %v1617
  %v1691 = vpop.f32.mrb[0].mxu0
  %v1692 = vadd.f32 %v1600, %v1691
  %v1693 = vpop.f32.mrb[0].mxu0
  %1694 = vmatprep.mubr.f32.mxu0 0.0
  %1695 = vmatmul.mubr.f32.gmra.mrb[0].mxu0 %v1619
  %v1696 = vpop.f32.mrb[0].mxu0
  %v1697 = vadd.f32 %v1605, %v1696
  %v1698 = vpop.f32.mrb[0].mxu0
  %1699 = vmatprep.mubr.f32.mxu0 0.0
  %1700 = vmatmul.mubr.f32.gmra.mrb[0].mxu0 %v1621
  %v1701 = vpop.f32.mrb[0].mxu0
  %v1702 = vadd.f32 %v1610, %v1701
  %v1703 = vpop.f32.mrb[0].mxu0
  %1704 = vmatprep.mubr.f32.mxu0 0.0
  %1705 = vmatmul.mubr.f32.gmra.mrb[0].mxu0 %v1623
  %v1706 = vpop.f32.mrb[0].mxu0
  %v1707 = vadd.f32 %v1615, %v1706
  %v1708 = vpop.f32.mrb[0].mxu0
  %1709 = vdwg.mxu0
  %1710 = vset.pattern.permute.xlu0 4
  %1711 = vperm.xlu0 %1710, %v1024
  %v1712 = vpop.permute.xlu0 %1711
  %1714 = vset.pattern.permute.xlu0 4
  %1715 = vperm.xlu0 %1714, %v1025
  %v1716 = vpop.permute.xlu0 %1715
  %1718 = vset.pattern.permute.xlu0 4
  %1719 = vperm.xlu0 %1718, %v1026
  %v1720 = vpop.permute.xlu0 %1719
  %1722 = vset.pattern.permute.xlu0 4
  %1723 = vperm.xlu0 %1722, %v1027
  %v1724 = vpop.permute.xlu0 %1723
  %v1726 = vmul.f32 %v1712, %v1020
  %v1727 = vmul.f32 %v1716, %v1021
  %v1728 = vmul.f32 %v1720, %v1022
  %v1729 = vmul.f32 %v1724, %v1023
  %v1730 = vadd.f32 %v1692, %v1726
  %v1731 = vadd.f32 %v1697, %v1727
  %v1732 = vadd.f32 %v1702, %v1728
  %v1733 = vadd.f32 %v1707, %v1729
  %v1734 = vadd.f32 %v1730, %v1731
  %v1735 = vadd.f32 %v1734, %v1732
  %v1736 = vadd.f32 %v1735, %v1733
  %v1737 = vrot.slane %v1736, 4
  %v1738 = vadd.f32 %v1736, %v1737
  %v1739 = vrot.slane %v1738, 2
  %v1740 = vadd.f32 %v1738, %v1739
  %v1741 = vrot.slane %v1740, 1
  %v1742 = vadd.f32 %v1740, %v1741
  %v1743 = vmul.f32 %v1742, %v1037
  %v1744 = vsub.f32 %v1730, %v1743
  %v1745 = vsub.f32 %v1731, %v1743
  %v1746 = vsub.f32 %v1732, %v1743
  %v1747 = vsub.f32 %v1733, %v1743
  %v1748 = vmul.f32 %v1744, %v1744
  %v1749 = vmul.f32 %v1745, %v1745
  %v1750 = vmul.f32 %v1746, %v1746
  %v1751 = vmul.f32 %v1747, %v1747
  %v1752 = vadd.f32 %v1748, %v1749
  %v1753 = vadd.f32 %v1752, %v1750
  %v1754 = vadd.f32 %v1753, %v1751
  %v1755 = vrot.slane %v1754, 4
  %v1756 = vadd.f32 %v1754, %v1755
  %v1757 = vrot.slane %v1756, 2
  %v1758 = vadd.f32 %v1756, %v1757
  %v1759 = vrot.slane %v1758, 1
  %v1760 = vadd.f32 %v1758, %v1759
  %v1761 = vmul.f32 %v1760, %v1037
  %v1762 = vadd.f32 %v1761, 1e-05
  %v1763 = vrsqrt.pop %v1762
  %v1764 = vmul.f32 %v1744, %v1763
  %v1765 = vmul.f32 %v1745, %v1763
  %v1766 = vmul.f32 %v1746, %v1763
  %v1767 = vmul.f32 %v1747, %v1763
  %1768 = vset.pattern.permute.xlu0 2
  %1769 = vperm.xlu0 %1768, %v1024
  %v1770 = vpop.permute.xlu0 %1769
  %1772 = vset.pattern.permute.xlu0 2
  %1773 = vperm.xlu0 %1772, %v1025
  %v1774 = vpop.permute.xlu0 %1773
  %1776 = vset.pattern.permute.xlu0 2
  %1777 = vperm.xlu0 %1776, %v1026
  %v1778 = vpop.permute.xlu0 %1777
  %1780 = vset.pattern.permute.xlu0 2
  %1781 = vperm.xlu0 %1780, %v1027
  %v1782 = vpop.permute.xlu0 %1781
  %v1784 = vmul.f32 %v1764, %v1770
  %v1785 = vmul.f32 %v1765, %v1774
  %v1786 = vmul.f32 %v1766, %v1778
  %v1787 = vmul.f32 %v1767, %v1782
  %1788 = vset.pattern.permute.xlu0 3
  %1789 = vperm.xlu0 %1788, %v1024
  %v1790 = vpop.permute.xlu0 %1789
  %1792 = vset.pattern.permute.xlu0 3
  %1793 = vperm.xlu0 %1792, %v1025
  %v1794 = vpop.permute.xlu0 %1793
  %1796 = vset.pattern.permute.xlu0 3
  %1797 = vperm.xlu0 %1796, %v1026
  %v1798 = vpop.permute.xlu0 %1797
  %1800 = vset.pattern.permute.xlu0 3
  %1801 = vperm.xlu0 %1800, %v1027
  %v1802 = vpop.permute.xlu0 %1801
  %v1804 = vadd.f32 %v1784, %v1790
  %v1805 = vadd.f32 %v1785, %v1794
  %v1806 = vadd.f32 %v1786, %v1798
  %v1807 = vadd.f32 %v1787, %v1802
  %v1808 = vld [vmem:[%s1 + $0x88] sm:$0xff]
  %v1809 = vld [vmem:[%s1 + $0x90] sm:$0xff]
  %v1810 = vld [vmem:[%s1 + $0x98] sm:$0xff]
  %v1811 = vld [vmem:[%s1 + $0xa0] sm:$0xff]
  %1813 = vset.pattern.permute.xlu0 32
  %1814 = vperm.xlu0 %1813, %v1808
  %v1815 = vpop.permute.xlu0 %1814
  %1818 = vset.pattern.permute.xlu0 32
  %1819 = vperm.xlu0 %1818, %v1809
  %v1820 = vpop.permute.xlu0 %1819
  %1823 = vset.pattern.permute.xlu0 32
  %1824 = vperm.xlu0 %1823, %v1810
  %v1825 = vpop.permute.xlu0 %1824
  %1828 = vset.pattern.permute.xlu0 32
  %1829 = vperm.xlu0 %1828, %v1811
  %v1830 = vpop.permute.xlu0 %1829
  %v1832 = vsel %vm1161, %v1808, 0
  %v1834 = vsel %vm1161, %v1809, 0
  %v1836 = vsel %vm1161, %v1810, 0
  %v1838 = vsel %vm1161, %v1811, 0
  %1840 = vmatprep.subr.mxu0 0.0
  %1841 = vmatpush1.msra.mxu0 %v1804
  %1842 = vmatprep.subr.mxu0 0.0
  %1843 = vmatpush1.msra.mxu0 %v1805
  %1844 = vmatprep.subr.mxu0 0.0
  %1845 = vmatpush1.msra.mxu0 %v1806
  %1846 = vmatprep.subr.mxu0 0.0
  %1847 = vmatpush1.msra.mxu0 %v1807
  %1848 = vmatprep.subr.mxu0 0.0
  %1849 = vmatpush1.msra.mxu0 0.0
  %1850 = vmatprep.subr.mxu0 0.0
  %1851 = vmatpush1.msra.mxu0 0.0
  %1852 = vmatprep.subr.mxu0 0.0
  %1853 = vmatpush1.msra.mxu0 0.0
  %1854 = vmatprep.subr.mxu0 0.0
  %1855 = vmatpush1.msra.mxu0 0.0
  %1856 = vmatprep.subr.mxu0 0.0
  %1857 = vmatpush1.msra.mxu0 0.0
  %1858 = vmatprep.subr.mxu0 0.0
  %1859 = vmatpush1.msra.mxu0 0.0
  %1860 = vmatprep.subr.mxu0 0.0
  %1861 = vmatpush1.msra.mxu0 0.0
  %1862 = vmatprep.subr.mxu0 0.0
  %1863 = vmatpush1.msra.mxu0 0.0
  %1864 = vmatprep.subr.mxu0 0.0
  %1865 = vmatpush1.msra.mxu0 0.0
  %1866 = vmatprep.subr.mxu0 0.0
  %1867 = vmatpush1.msra.mxu0 0.0
  %1868 = vmatprep.subr.mxu0 0.0
  %1869 = vmatpush1.msra.mxu0 0.0
  %1870 = vmatprep.subr.mxu0 0.0
  %1871 = vmatpush1.msra.mxu0 0.0
  %1872 = vmatprep.subr.mxu0 0.0
  %1873 = vmatpush1.msra.mxu0 0.0
  %1874 = vmatprep.subr.mxu0 0.0
  %1875 = vmatpush1.msra.mxu0 0.0
  %1876 = vmatprep.subr.mxu0 0.0
  %1877 = vmatpush1.msra.mxu0 0.0
  %1878 = vmatprep.subr.mxu0 0.0
  %1879 = vmatpush1.msra.mxu0 0.0
  %1880 = vmatprep.subr.mxu0 0.0
  %1881 = vmatpush1.msra.mxu0 0.0
  %1882 = vmatprep.subr.mxu0 0.0
  %1883 = vmatpush1.msra.mxu0 0.0
  %1884 = vmatprep.subr.mxu0 0.0
  %1885 = vmatpush1.msra.mxu0 0.0
  %1886 = vmatprep.subr.mxu0 0.0
  %1887 = vmatpush1.msra.mxu0 0.0
  %1888 = vmatprep.subr.mxu0 0.0
  %1889 = vmatpush1.msra.mxu0 0.0
  %1890 = vmatprep.subr.mxu0 0.0
  %1891 = vmatpush1.msra.mxu0 0.0
  %1892 = vmatprep.subr.mxu0 0.0
  %1893 = vmatpush1.msra.mxu0 0.0
  %1894 = vmatprep.subr.mxu0 0.0
  %1895 = vmatpush1.msra.mxu0 0.0
  %1896 = vmatprep.subr.mxu0 0.0
  %1897 = vmatpush1.msra.mxu0 0.0
  %1898 = vmatprep.subr.mxu0 0.0
  %1899 = vmatpush1.msra.mxu0 0.0
  %1900 = vmatprep.subr.mxu0 0.0
  %1901 = vmatpush1.msra.mxu0 0.0
  %1902 = vmatprep.subr.mxu0 0.0
  %1903 = vmatpush1.msra.mxu0 0.0
  %1904 = vmatprep.mubr.f32.mxu0 0.0
  %1905 = vmatmul.mubr.f32.gmra.mrb[0].mxu0 %v1832
  %v1906 = vpop.f32.mrb[0].mxu0
  %v1907 = vadd.f32 %v1815, %v1906
  %v1908 = vpop.f32.mrb[0].mxu0
  %1909 = vmatprep.mubr.f32.mxu0 0.0
  %1910 = vmatmul.mubr.f32.gmra.mrb[0].mxu0 %v1834
  %v1911 = vpop.f32.mrb[0].mxu0
  %v1912 = vadd.f32 %v1820, %v1911
  %v1913 = vpop.f32.mrb[0].mxu0
  %1914 = vmatprep.mubr.f32.mxu0 0.0
  %1915 = vmatmul.mubr.f32.gmra.mrb[0].mxu0 %v1836
  %v1916 = vpop.f32.mrb[0].mxu0
  %v1917 = vadd.f32 %v1825, %v1916
  %v1918 = vpop.f32.mrb[0].mxu0
  %1919 = vmatprep.mubr.f32.mxu0 0.0
  %1920 = vmatmul.mubr.f32.gmra.mrb[0].mxu0 %v1838
  %v1921 = vpop.f32.mrb[0].mxu0
  %v1922 = vadd.f32 %v1830, %v1921
  %v1923 = vpop.f32.mrb[0].mxu0
  %1924 = vdwg.mxu0
  %v1925 = vmul.f32 %v1907, 0.5
  %v1926 = vmul.f32 %v1912, 0.5
  %v1927 = vmul.f32 %v1917, 0.5
  %v1928 = vmul.f32 %v1922, 0.5
  %v1929 = vmul.f32 %v1907, 0.70710677
  %v1930 = vmul.f32 %v1912, 0.70710677
  %v1931 = vmul.f32 %v1917, 0.70710677
  %v1932 = vmul.f32 %v1922, 0.70710677
  %v1933 = vand.u32 2147483647, %v1929
  %v1934 = vand.u32 2147483647, %v1930
  %v1935 = vand.u32 2147483647, %v1931
  %v1936 = vand.u32 2147483647, %v1932
  %v1937 = vmul.f32 %v1933, 0.3275911
  %v1938 = vmul.f32 %v1934, 0.3275911
  %v1939 = vmul.f32 %v1935, 0.3275911
  %v1940 = vmul.f32 %v1936, 0.3275911
  %v1941 = vadd.f32 %v1937, 1.0
  %v1942 = vadd.f32 %v1938, 1.0
  %v1943 = vadd.f32 %v1939, 1.0
  %v1944 = vadd.f32 %v1940, 1.0
  %v1945 = vrcp.pop %v1941
  %v1946 = vmul.f32 1.0, %v1945
  %v1947 = vrcp.pop %v1942
  %v1948 = vmul.f32 1.0, %v1947
  %v1949 = vrcp.pop %v1943
  %v1950 = vmul.f32 1.0, %v1949
  %v1951 = vrcp.pop %v1944
  %v1952 = vmul.f32 1.0, %v1951
  %v1953 = vmul.f32 %v1946, 1.0614054
  %v1954 = vmul.f32 %v1948, 1.0614054
  %v1955 = vmul.f32 %v1950, 1.0614054
  %v1956 = vmul.f32 %v1952, 1.0614054
  %v1957 = vadd.f32 %v1953, -1.4531521
  %v1958 = vadd.f32 %v1954, -1.4531521
  %v1959 = vadd.f32 %v1955, -1.4531521
  %v1960 = vadd.f32 %v1956, -1.4531521
  %v1961 = vmul.f32 %v1946, %v1957
  %v1962 = vmul.f32 %v1948, %v1958
  %v1963 = vmul.f32 %v1950, %v1959
  %v1964 = vmul.f32 %v1952, %v1960
  %v1965 = vadd.f32 %v1961, 1.4214138
  %v1966 = vadd.f32 %v1962, 1.4214138
  %v1967 = vadd.f32 %v1963, 1.4214138
  %v1968 = vadd.f32 %v1964, 1.4214138
  %v1969 = vmul.f32 %v1946, %v1965
  %v1970 = vmul.f32 %v1948, %v1966
  %v1971 = vmul.f32 %v1950, %v1967
  %v1972 = vmul.f32 %v1952, %v1968
  %v1973 = vadd.f32 %v1969, -0.28449672
  %v1974 = vadd.f32 %v1970, -0.28449672
  %v1975 = vadd.f32 %v1971, -0.28449672
  %v1976 = vadd.f32 %v1972, -0.28449672
  %v1977 = vmul.f32 %v1946, %v1973
  %v1978 = vmul.f32 %v1948, %v1974
  %v1979 = vmul.f32 %v1950, %v1975
  %v1980 = vmul.f32 %v1952, %v1976
  %v1981 = vadd.f32 %v1977, 0.2548296
  %v1982 = vadd.f32 %v1978, 0.2548296
  %v1983 = vadd.f32 %v1979, 0.2548296
  %v1984 = vadd.f32 %v1980, 0.2548296
  %v1985 = vmul.f32 %v1946, %v1981
  %v1986 = vmul.f32 %v1948, %v1982
  %v1987 = vmul.f32 %v1950, %v1983
  %v1988 = vmul.f32 %v1952, %v1984
  %v1989 = vsub.f32 0.0, %v1933
  %v1990 = vsub.f32 0.0, %v1934
  %v1991 = vsub.f32 0.0, %v1935
  %v1992 = vsub.f32 0.0, %v1936
  %v1993 = vmul.f32 %v1989, %v1933
  %v1994 = vmul.f32 %v1990, %v1934
  %v1995 = vmul.f32 %v1991, %v1935
  %v1996 = vmul.f32 %v1992, %v1936
  %v1997 = vmul.f32 %v1993, 1.442695
  %v1998 = vpow.pop %v1997
  %v1999 = vmul.f32 %v1994, 1.442695
  %v2000 = vpow.pop %v1999
  %v2001 = vmul.f32 %v1995, 1.442695
  %v2002 = vpow.pop %v2001
  %v2003 = vmul.f32 %v1996, 1.442695
  %v2004 = vpow.pop %v2003
  %v2005 = vmul.f32 %v1985, %v1998
  %v2006 = vmul.f32 %v1986, %v2000
  %v2007 = vmul.f32 %v1987, %v2002
  %v2008 = vmul.f32 %v1988, %v2004
  %v2009 = vsub.f32 1.0, %v2005
  %v2010 = vsub.f32 1.0, %v2006
  %v2011 = vsub.f32 1.0, %v2007
  %v2012 = vsub.f32 1.0, %v2008
  %vm2013 = vcmp.ge.f32.partialorder %v1929, 0.0
  %vm2014 = vcmp.ge.f32.partialorder %v1930, 0.0
  %vm2015 = vcmp.ge.f32.partialorder %v1931, 0.0
  %vm2016 = vcmp.ge.f32.partialorder %v1932, 0.0
  %v2017 = vsub.f32 0.0, %v2009
  %v2018 = vsub.f32 0.0, %v2010
  %v2019 = vsub.f32 0.0, %v2011
  %v2020 = vsub.f32 0.0, %v2012
  %v2021 = vsel %vm2013, %v2009, %v2017
  %v2022 = vsel %vm2014, %v2010, %v2018
  %v2023 = vsel %vm2015, %v2011, %v2019
  %v2024 = vsel %vm2016, %v2012, %v2020
  %v2025 = vadd.f32 %v2021, 1.0
  %v2026 = vadd.f32 %v2022, 1.0
  %v2027 = vadd.f32 %v2023, 1.0
  %v2028 = vadd.f32 %v2024, 1.0
  %v2029 = vmul.f32 %v1925, %v2025
  %v2030 = vmul.f32 %v1926, %v2026
  %v2031 = vmul.f32 %v1927, %v2027
  %v2032 = vmul.f32 %v1928, %v2028
  %v2033 = vld [vmem:[%s1 + $0xa8] sm:$0xff]
  %v2034 = vld [vmem:[%s1 + $0xb0] sm:$0xff]
  %v2035 = vld [vmem:[%s1 + $0xb8] sm:$0xff]
  %v2036 = vld [vmem:[%s1 + $0xc0] sm:$0xff]
  %2038 = vset.pattern.permute.xlu0 32
  %2039 = vperm.xlu0 %2038, %v2033
  %v2040 = vpop.permute.xlu0 %2039
  %2043 = vset.pattern.permute.xlu0 32
  %2044 = vperm.xlu0 %2043, %v2034
  %v2045 = vpop.permute.xlu0 %2044
  %2048 = vset.pattern.permute.xlu0 32
  %2049 = vperm.xlu0 %2048, %v2035
  %v2050 = vpop.permute.xlu0 %2049
  %2053 = vset.pattern.permute.xlu0 32
  %2054 = vperm.xlu0 %2053, %v2036
  %v2055 = vpop.permute.xlu0 %2054
  %v2057 = vsel %vm1161, %v2033, 0
  %v2059 = vsel %vm1161, %v2034, 0
  %v2061 = vsel %vm1161, %v2035, 0
  %v2063 = vsel %vm1161, %v2036, 0
  %2065 = vmatprep.subr.mxu0 0.0
  %2066 = vmatpush1.msra.mxu0 %v2029
  %2067 = vmatprep.subr.mxu0 0.0
  %2068 = vmatpush1.msra.mxu0 %v2030
  %2069 = vmatprep.subr.mxu0 0.0
  %2070 = vmatpush1.msra.mxu0 %v2031
  %2071 = vmatprep.subr.mxu0 0.0
  %2072 = vmatpush1.msra.mxu0 %v2032
  %2073 = vmatprep.subr.mxu0 0.0
  %2074 = vmatpush1.msra.mxu0 0.0
  %2075 = vmatprep.subr.mxu0 0.0
  %2076 = vmatpush1.msra.mxu0 0.0
  %2077 = vmatprep.subr.mxu0 0.0
  %2078 = vmatpush1.msra.mxu0 0.0
  %2079 = vmatprep.subr.mxu0 0.0
  %2080 = vmatpush1.msra.mxu0 0.0
  %2081 = vmatprep.subr.mxu0 0.0
  %2082 = vmatpush1.msra.mxu0 0.0
  %2083 = vmatprep.subr.mxu0 0.0
  %2084 = vmatpush1.msra.mxu0 0.0
  %2085 = vmatprep.subr.mxu0 0.0
  %2086 = vmatpush1.msra.mxu0 0.0
  %2087 = vmatprep.subr.mxu0 0.0
  %2088 = vmatpush1.msra.mxu0 0.0
  %2089 = vmatprep.subr.mxu0 0.0
  %2090 = vmatpush1.msra.mxu0 0.0
  %2091 = vmatprep.subr.mxu0 0.0
  %2092 = vmatpush1.msra.mxu0 0.0
  %2093 = vmatprep.subr.mxu0 0.0
  %2094 = vmatpush1.msra.mxu0 0.0
  %2095 = vmatprep.subr.mxu0 0.0
  %2096 = vmatpush1.msra.mxu0 0.0
  %2097 = vmatprep.subr.mxu0 0.0
  %2098 = vmatpush1.msra.mxu0 0.0
  %2099 = vmatprep.subr.mxu0 0.0
  %2100 = vmatpush1.msra.mxu0 0.0
  %2101 = vmatprep.subr.mxu0 0.0
  %2102 = vmatpush1.msra.mxu0 0.0
  %2103 = vmatprep.subr.mxu0 0.0
  %2104 = vmatpush1.msra.mxu0 0.0
  %2105 = vmatprep.subr.mxu0 0.0
  %2106 = vmatpush1.msra.mxu0 0.0
  %2107 = vmatprep.subr.mxu0 0.0
  %2108 = vmatpush1.msra.mxu0 0.0
  %2109 = vmatprep.subr.mxu0 0.0
  %2110 = vmatpush1.msra.mxu0 0.0
  %2111 = vmatprep.subr.mxu0 0.0
  %2112 = vmatpush1.msra.mxu0 0.0
  %2113 = vmatprep.subr.mxu0 0.0
  %2114 = vmatpush1.msra.mxu0 0.0
  %2115 = vmatprep.subr.mxu0 0.0
  %2116 = vmatpush1.msra.mxu0 0.0
  %2117 = vmatprep.subr.mxu0 0.0
  %2118 = vmatpush1.msra.mxu0 0.0
  %2119 = vmatprep.subr.mxu0 0.0
  %2120 = vmatpush1.msra.mxu0 0.0
  %2121 = vmatprep.subr.mxu0 0.0
  %2122 = vmatpush1.msra.mxu0 0.0
  %2123 = vmatprep.subr.mxu0 0.0
  %2124 = vmatpush1.msra.mxu0 0.0
  %2125 = vmatprep.subr.mxu0 0.0
  %2126 = vmatpush1.msra.mxu0 0.0
  %2127 = vmatprep.subr.mxu0 0.0
  %2128 = vmatpush1.msra.mxu0 0.0
  %2129 = vmatprep.mubr.f32.mxu0 0.0
  %2130 = vmatmul.mubr.f32.gmra.mrb[0].mxu0 %v2057
  %v2131 = vpop.f32.mrb[0].mxu0
  %v2132 = vadd.f32 %v2040, %v2131
  %v2133 = vpop.f32.mrb[0].mxu0
  %2134 = vmatprep.mubr.f32.mxu0 0.0
  %2135 = vmatmul.mubr.f32.gmra.mrb[0].mxu0 %v2059
  %v2136 = vpop.f32.mrb[0].mxu0
  %v2137 = vadd.f32 %v2045, %v2136
  %v2138 = vpop.f32.mrb[0].mxu0
  %2139 = vmatprep.mubr.f32.mxu0 0.0
  %2140 = vmatmul.mubr.f32.gmra.mrb[0].mxu0 %v2061
  %v2141 = vpop.f32.mrb[0].mxu0
  %v2142 = vadd.f32 %v2050, %v2141
  %v2143 = vpop.f32.mrb[0].mxu0
  %2144 = vmatprep.mubr.f32.mxu0 0.0
  %2145 = vmatmul.mubr.f32.gmra.mrb[0].mxu0 %v2063
  %v2146 = vpop.f32.mrb[0].mxu0
  %v2147 = vadd.f32 %v2055, %v2146
  %v2148 = vpop.f32.mrb[0].mxu0
  %2149 = vdwg.mxu0
  %2150 = vset.pattern.permute.xlu0 5
  %2151 = vperm.xlu0 %2150, %v1024
  %v2152 = vpop.permute.xlu0 %2151
  %2154 = vset.pattern.permute.xlu0 5
  %2155 = vperm.xlu0 %2154, %v1025
  %v2156 = vpop.permute.xlu0 %2155
  %2158 = vset.pattern.permute.xlu0 5
  %2159 = vperm.xlu0 %2158, %v1026
  %v2160 = vpop.permute.xlu0 %2159
  %2162 = vset.pattern.permute.xlu0 5
  %2163 = vperm.xlu0 %2162, %v1027
  %v2164 = vpop.permute.xlu0 %2163
  %v2166 = vmul.f32 %v2152, %v1730
  %v2167 = vmul.f32 %v2156, %v1731
  %v2168 = vmul.f32 %v2160, %v1732
  %v2169 = vmul.f32 %v2164, %v1733
  %v2170 = vadd.f32 %v2132, %v2166
  %v2171 = vadd.f32 %v2137, %v2167
  %v2172 = vadd.f32 %v2142, %v2168
  %v2173 = vadd.f32 %v2147, %v2169
  %2174 = vst [vmem:[%s2] sm:$0xff] %v2170
  %2175 = vst [vmem:[%s2 + $0x8] sm:$0xff] %v2171
  %2176 = vst [vmem:[%s2 + $0x10] sm:$0xff] %v2172
  %2177 = vst [vmem:[%s2 + $0x18] sm:$0xff] %v2173
  // Predicated region
  $region10: #{lfel_forward.1} parent=0 // pred_check
    _
  $region11: #{lfel_forward.1} parent=0 // pred_check_branch
    %2179 = sbr.rel (0) target = $region13
  $region12: #{lfel_forward.1} parent=0 // pred_region
    _
  $region13: #{lfel_forward.1} parent=0 // pred_fallthru
    _
  // Predicated region
  $region14: #{lfel_forward.1} parent=0 // pred_check
    _
  $region15: #{lfel_forward.1} parent=0 // pred_check_branch
    %2181 = sbr.rel (0) target = $region17
  $region16: #{lfel_forward.1} parent=0 // pred_region
    _
  $region17: #{lfel_forward.1} parent=0 // pred_fallthru
    _

</llo_original>
